<compile_context>
chip_gen: v6e
topology: v6e:2x2x1
jax: 0.10.0
libtpu: 0.0.40
codegen_flags: <defaults>
</compile_context>

<pallas_src>
import functools

import jax
import jax.numpy as jnp
from jax.experimental import pallas as pl
from jax.experimental.pallas import tpu as pltpu

ACTIVATION = "ELU"               # 'ELU' | 'ReLU' | 'LeakyReLU' (monotone -> pool fusion exact)
MATMUL_DTYPE = jnp.bfloat16      # MXU-native operand / inter-block dtype; accumulation stays f32
_BN_EPS = 1e-5
_MONOTONE_ACTS = ("ELU", "ReLU", "LeakyReLU")


def _round_up(n, m):
    return ((n + m - 1) // m) * m


def _tpu_kind():
    try:
        return jax.devices()[0].device_kind.lower()
    except Exception:
        return ""


# ----------------------------------------------------------------------------
# Pallas kernels
# ----------------------------------------------------------------------------
def _apply_act(y, act):
    if act == "ELU":             # alpha = 1.0
        # exp(min(y,0)) - 1 kept for Mosaic lowering compatibility; ULP loss near 0 < 1e-7.
        return jnp.where(y > 0, y, jnp.exp(jnp.minimum(y, 0.0)) - 1.0)
    if act == "ReLU":
        return jnp.maximum(y, 0.0)
    if act == "LeakyReLU":       # PyTorch default negative_slope = 0.01
        return jnp.where(y > 0, y, 0.01 * y)
    return y


def _conv_pool_kernel(p_ref, w_ref, shift_ref, o_ref, *, act):
    """o = act( max(pa @ w, pb @ w) + shift ) with a single MXU weight push.

    p_ref: (2, TP, CK) -- the two MaxPool((1,2)) candidate patches stacked; they
    are concatenated along rows so W is pushed into the MXU once per tile.  The
    BN scale is pre-folded into w; shift is the remaining BN term.  Taking the
    max before the (monotone) activation is exact.
    """
    tp = o_ref.shape[0]
    ab = jnp.concatenate([p_ref[0], p_ref[1]], axis=0)               # (2*TP, CK)
    y = jnp.dot(ab, w_ref[...], preferred_element_type=jnp.float32)  # (2*TP, C)
    y = jnp.maximum(y[:tp], y[tp:]) + shift_ref[...]
    o_ref[...] = _apply_act(y, act).astype(o_ref.dtype)


def _block12_kernel(x_ref, w_ref, shift_ref, o_ref, *, act, c_out, c_pad):
    """Blocks 1+2 in width-on-lanes (transposed) form.

    x_ref: (12, TW) signal slices, row = h*6 + s (s = pool candidate + tap).
    w_ref: (2*c_pad, 12) stacked candidate weights, BN scale folded in
           (rows [0:25] = candidate col 4p, rows [c_pad:c_pad+25] = col 4p+1).
    o = act( max(W0 @ x, W1 @ x) + shift ), lane-dense loads / epilogue / stores.
    """
    y = jnp.dot(w_ref[...], x_ref[...], preferred_element_type=jnp.float32)  # (2*c_pad, TW)
    y = jnp.maximum(y[:c_out], y[c_pad:c_pad + c_out]) + shift_ref[...]
    o_ref[...] = _apply_act(y, act).astype(o_ref.dtype)


# ----------------------------------------------------------------------------
# Generation-aware tiling (review items: v7x core count, v5e/v6e tile size)
# ----------------------------------------------------------------------------
def _row_block(P):
    """Row-tile size + optional vmem limit for the patch-matmul blocks."""
    kind = _tpu_kind()
    if "v7" in kind:
        # 2 TensorCores/chip: once there is enough work, make the "parallel"
        # row axis have >=2 blocks so both cores get one.  VMEM is not the
        # constraint for these tiles (64 MiB physical).
        if P <= 128:
            return P, None
        return min(512, _round_up(pl.cdiv(P, 2), 16)), None
    # v5e / v6e: a single TensorCore -- fewer, bigger tiles amortize the
    # ~0.35us per-grid-step overhead.  Only very large batches tile at all;
    # raise the scoped-VMEM limit then (v5e's default is only 16 MiB).
    if P <= 2048:
        return P, None
    return 2048, 32 << 20


def _lane_block(W):
    """Lane-tile size for the width-on-lanes block-1+2 kernel."""
    kind = _tpu_kind()
    if "v7" in kind and W > 512:
        return _round_up(pl.cdiv(W, 2), 128)
    return W if W <= 16384 else 16384


# ----------------------------------------------------------------------------
# Pallas wrappers (no host zero-padding: blocks equal full dims or are tiled)
# ----------------------------------------------------------------------------
def fused_conv_block(pab, w, shift, act):
    """pab: (2, P, CK) bf16 stacked pool-candidate patches; w: (CK, C) bf16 with
    BN scale folded; shift: (C,) f32.  Returns (P, C) bf16."""
    _, P, CK = pab.shape
    C = w.shape[1]
    TP, vmem_limit = _row_block(P)
    grid = (pl.cdiv(P, TP),)

    patch_kwargs = {}
    if grid[0] > 1:
        # With this little compute per tile the default double-buffering can
        # leave the small patch DMAs exposed; a third buffer is nearly free.
        patch_kwargs["pipeline_mode"] = pl.Buffered(3)
    cp = dict(dimension_semantics=("parallel",))
    if vmem_limit is not None:
        cp["vmem_limit_bytes"] = vmem_limit

    return pl.pallas_call(
        functools.partial(_conv_pool_kernel, act=act),
        out_shape=jax.ShapeDtypeStruct((P, C), MATMUL_DTYPE),
        grid=grid,
        in_specs=[
            pl.BlockSpec((2, TP, CK), lambda i: (0, i, 0), **patch_kwargs),
            pl.BlockSpec((CK, C), lambda i: (0, 0)),
            pl.BlockSpec((1, C), lambda i: (0, 0)),
        ],
        out_specs=pl.BlockSpec((TP, C), lambda i: (i, 0)),
        compiler_params=pltpu.CompilerParams(**cp),
    )(pab, w, shift.reshape(1, C).astype(jnp.float32))


def fused_block12(xcols, w_stack, shift, act, c_out, c_pad):
    """xcols: (12, B*Wp) bf16; w_stack: (2*c_pad, 12) bf16; shift: (c_out,) f32.
    Returns (c_out, B*Wp) bf16 (channels on sublanes, width positions on lanes)."""
    K2, BW = xcols.shape
    CP2 = w_stack.shape[0]
    TW = _lane_block(BW)
    return pl.pallas_call(
        functools.partial(_block12_kernel, act=act, c_out=c_out, c_pad=c_pad),
        out_shape=jax.ShapeDtypeStruct((c_out, BW), MATMUL_DTYPE),
        grid=(pl.cdiv(BW, TW),),
        in_specs=[
            pl.BlockSpec((K2, TW), lambda i: (0, i)),
            pl.BlockSpec((CP2, K2), lambda i: (0, 0)),
            pl.BlockSpec((c_out, 1), lambda i: (0, 0)),
        ],
        out_specs=pl.BlockSpec((c_out, TW), lambda i: (0, i)),
        compiler_params=pltpu.CompilerParams(dimension_semantics=("parallel",)),
    )(xcols, w_stack, shift.reshape(c_out, 1).astype(jnp.float32))


# ----------------------------------------------------------------------------
# Glue: BN folding, operand layout (plain JAX, constant-size gathers/slices)
# ----------------------------------------------------------------------------
def _bn_scale_shift(bn):
    scale = bn["gamma"] / jnp.sqrt(bn["var"] + _BN_EPS)
    shift = bn["beta"] - bn["mean"] * scale
    return scale, shift


def _stacked_width_patches(xpad_bwc, positions, K=5):
    """(B, Wpad, C), (Wp,) pooled starts -> (2, B*Wp, K*C): the two pool
    candidate columns built with ONE gather, feature order (k, c)."""
    B, _, C = xpad_bwc.shape
    starts = jnp.stack([positions, positions + 1])                   # (2, Wp)
    idx = starts[:, :, None] + jnp.arange(K)[None, None, :]          # (2, Wp, K)
    p = xpad_bwc[:, idx, :]                                          # (B, 2, Wp, K, C)
    return jnp.transpose(p, (1, 0, 2, 3, 4)).reshape(2, B * positions.shape[0], K * C)


def _block12_operands(x_b2w, params):
    """Blocks 1+2: compose conv1 o conv2 into one exact (2,5) conv, fold the BN2
    scale, and lay the input out width-on-lanes for the transposed kernel."""
    B = x_b2w.shape[0]
    xpad = jnp.pad(x_b2w, ((0, 0), (0, 0), (25, 25)))                # (B, 2, 800) bf16
    w_conv = x_b2w.shape[-1] + 2 * 25 - 5 + 1                        # 796
    wp = (w_conv - 2) // 4 + 1                                       # 199

    # x operand: row (h, s) with s = candidate + tap in 0..5, column (b, p).
    taps = jnp.stack([xpad[:, :, s: s + 4 * wp: 4] for s in range(6)], axis=2)  # (B,2,6,wp)
    xcols = jnp.transpose(taps, (1, 2, 0, 3)).reshape(2 * 6, B * wp)            # (12, B*wp)

    # Composed (2,5) conv weight with BN2 scale folded in.
    w1 = params["conv1_w"][:, 0, 0, :]                               # (25, 5)      [i, k]
    w2 = params["conv2_w"][:, :, :, 0]                               # (25, 25, 2)  [o, i, h]
    wc = jnp.einsum("oih,ik->ohk", w2, w1)                           # (25, 2, 5)   [o, h, k]
    scale, shift = _bn_scale_shift(params["bn2"])
    wc = wc * scale[:, None, None]
    w_t0 = jnp.pad(wc, ((0, 0), (0, 0), (0, 1))).reshape(25, 12)     # candidate col 4p
    w_t1 = jnp.pad(wc, ((0, 0), (0, 0), (1, 0))).reshape(25, 12)     # candidate col 4p+1
    c_pad = 32                                                       # 8-aligned row split
    w_stack = jnp.zeros((2 * c_pad, 12), jnp.float32)
    w_stack = w_stack.at[:25].set(w_t0).at[c_pad:c_pad + 25].set(w_t1)
    return xcols, w_stack.astype(MATMUL_DTYPE), shift, wp, c_pad


# ----------------------------------------------------------------------------
# Parameters (deterministic, PyTorch-shaped; non-trivial BN stats so the
# scale/shift fold is actually exercised by the correctness check)
# ----------------------------------------------------------------------------
def init_params(key):
    ks = jax.random.split(key, 10)

    def conv_w(k, cout, cin, kh, kw):
        fan_in = cin * kh * kw
        return jax.random.normal(k, (cout, cin, kh, kw), jnp.float32) / jnp.sqrt(fan_in)

    p = {
        "conv1_w": conv_w(ks[0], 25, 1, 1, 5),
        "conv2_w": conv_w(ks[1], 25, 25, 2, 1),
        "conv3_w": conv_w(ks[2], 50, 25, 1, 5),
        "conv4_w": conv_w(ks[3], 100, 50, 1, 5),
        "conv5_w": conv_w(ks[4], 200, 100, 1, 5),
        "fc_w": jax.random.normal(ks[5], (2, 400), jnp.float32) / jnp.sqrt(400.0),
        "fc_b": jnp.zeros((2,), jnp.float32),
    }
    for i, (name, c) in enumerate([("bn2", 25), ("bn3", 50), ("bn4", 100), ("bn5", 200)]):
        g, b, m, v = jax.random.split(ks[6 + i], 4)
        p[name] = dict(
            gamma=jax.random.uniform(g, (c,), jnp.float32, 0.5, 1.5),
            beta=0.1 * jax.random.normal(b, (c,), jnp.float32),
            mean=0.1 * jax.random.normal(m, (c,), jnp.float32),
            var=jax.random.uniform(v, (c,), jnp.float32, 0.5, 1.5),
        )
    return p


# ----------------------------------------------------------------------------
# Forward pass (matches DeepConvNet.forward in eval mode)
# ----------------------------------------------------------------------------
def deep_conv_net_forward(x_nchw, params, activation=ACTIVATION):
    # The max-pool is fused before the activation; exact only for monotone acts.
    assert activation in _MONOTONE_ACTS, activation

    B = x_nchw.shape[0]
    x = x_nchw[:, 0].astype(MATMUL_DTYPE)                            # (B, 2, 750) bf16

    # ---- blocks 1+2: composed (2,5) conv + BN2 + act + MaxPool((1,2),(1,4)),
    #      lane-dense width-on-lanes transposed matmul, ONE pallas_call.
    xcols, w_stack, shift, wp, c_pad = _block12_operands(x, params)
    y = fused_block12(xcols, w_stack, shift, activation, c_out=25, c_pad=c_pad)
    x = jnp.transpose(y.reshape(25, B, wp), (1, 2, 0))               # (B, 199, 25) bf16
    # TODO(synk): Dropout(p=0.5) is identity in eval mode; training-mode RNG dropout not implemented.

    # ---- blocks 3/4/5: conv (1x5, pad (0,7)) + BN + act + MaxPool((1,2),(1,8)),
    #      one pallas_call each (stacked pool-candidate patches, single dot).
    #      C=50/100 outputs stay row-major (lanes scale with batch via row tiling).
    for wname, bnname, cout in (("conv3_w", "bn3", 50),
                                ("conv4_w", "bn4", 100),
                                ("conv5_w", "bn5", 200)):
        w = params[wname][:, :, 0, :]                                # (Cout, Cin, 5)
        cin = w.shape[1]
        wmat = jnp.transpose(w, (2, 1, 0)).reshape(5 * cin, cout)    # rows = (k, ci)
        scale, shift = _bn_scale_shift(params[bnname])
        wmat = (wmat * scale[None, :]).astype(MATMUL_DTYPE)

        xpad = jnp.pad(x, ((0, 0), (7, 7), (0, 0)))                  # (B, W+14, Cin) bf16
        w_conv = x.shape[1] + 2 * 7 - 5 + 1
        wp = (w_conv - 2) // 8 + 1
        pos = jnp.arange(wp) * 8
        pab = _stacked_width_patches(xpad, pos)                      # (2, B*wp, 5*cin) bf16
        y = fused_conv_block(pab, wmat, shift, activation)           # (B*wp, cout) bf16
        x = y.reshape(B, wp, cout)

    # ---- FC head: (B,400)x(400,2) is a tiny GEMV with a 2-lane output -- plain
    # XLA is cheaper than a pallas_call launch.  x is (B, 2_w, 200_c); PyTorch
    # flattens NCHW as (c, w), so permute the tiny FC weight instead.
    feat = x.reshape(B, 400)                                         # index = w*200 + c
    fcw = jnp.transpose(params["fc_w"].reshape(2, 200, 2), (2, 1, 0)).reshape(400, 2)
    return (jnp.dot(feat, fcw.astype(MATMUL_DTYPE),
                    preferred_element_type=jnp.float32) + params["fc_b"])


# ----------------------------------------------------------------------------
# Pure-JAX f32 reference (validation only; the real path is the kernels above)
# ----------------------------------------------------------------------------
def reference_forward(x_nchw, params, activation=ACTIVATION):
    def conv(x, w, pad_w):
        return jax.lax.conv_general_dilated(
            x, w, window_strides=(1, 1), padding=((0, 0), (pad_w, pad_w)),
            dimension_numbers=("NCHW", "OIHW", "NCHW"),
            precision=jax.lax.Precision.HIGHEST)

    def bn(x, p):
        s = p["gamma"] / jnp.sqrt(p["var"] + _BN_EPS)
        return x * s[None, :, None, None] + (p["beta"] - p["mean"] * s)[None, :, None, None]

    def pool_w(x, stride):
        wp = (x.shape[-1] - 2) // stride + 1
        idx = jnp.arange(wp) * stride
        return jnp.maximum(x[..., idx], x[..., idx + 1])

    act = lambda y: _apply_act(y, activation)
    x = x_nchw.astype(jnp.float32)
    x = conv(x, params["conv1_w"], 25)
    x = conv(x, params["conv2_w"], 0)
    x = pool_w(act(bn(x, params["bn2"])), 4)
    for wname, bnname in (("conv3_w", "bn3"), ("conv4_w", "bn4"), ("conv5_w", "bn5")):
        x = conv(x, params[wname], 7)
        x = pool_w(act(bn(x, params[bnname])), 8)
    feat = x.reshape(x.shape[0], -1)
    return jnp.matmul(feat, params["fc_w"].T,
                      precision=jax.lax.Precision.HIGHEST) + params["fc_b"]


# ----------------------------------------------------------------------------
if __name__ == "__main__":
    key = jax.random.PRNGKey(0)
    pkey, xkey = jax.random.split(key)
    params = init_params(pkey)

    # Input shape implied by the module: the Linear(400, 2) head forces
    # (B, 1, 2, 750) NCHW.  Small batch of 2.
    x = jax.random.normal(xkey, (2, 1, 2, 750), jnp.float32)

    fwd = jax.jit(functools.partial(deep_conv_net_forward, activation=ACTIVATION))
    out = jax.block_until_ready(fwd(x, params))
    assert out.shape == (2, 2), out.shape
    assert bool(jnp.all(jnp.isfinite(out)))

    # Correctness smoke-test vs pure-JAX f32 reference (tolerance sized for the
    # bf16 MXU operands; random BN stats exercise the scale/shift fold).
    ref = jax.block_until_ready(
        jax.jit(functools.partial(reference_forward, activation=ACTIVATION))(x, params))
    assert bool(jnp.allclose(out, ref, rtol=0.15, atol=0.15)), (out, ref)

    print("KERNEL_OK")
</pallas_src>

<mosaic_0001>
module attributes {stable_mosaic.version = 11 : i64} {
  func.func @_block12_kernel(%arg0: i32, %arg1: memref<12x398xbf16, #tpu.memory_space<vmem>>, %arg2: memref<64x12xbf16, #tpu.memory_space<vmem>>, %arg3: memref<25x1xf32, #tpu.memory_space<vmem>>, %arg4: memref<25x398xbf16, #tpu.memory_space<vmem>>) attributes {dimension_semantics = [#tpu.dimension_semantics<parallel>], iteration_bounds = array<i64: 1>, scalar_prefetch = 0 : i64, scratch_operands = 0 : i64, tpu.core_type = #tpu.core_type<tc>, window_params = [{transform_indices = @transform_0, window_bounds = array<i64: 12, 398>}, {pipeline_mode = #tpu.pipeline_mode<synchronous>, transform_indices = @transform_1, window_bounds = array<i64: 64, 12>}, {pipeline_mode = #tpu.pipeline_mode<synchronous>, transform_indices = @transform_2, window_bounds = array<i64: 25, 1>}, {transform_indices = @transform_3, window_bounds = array<i64: 25, 398>}]} {
    %c0 = arith.constant 0 : index
    %c0_0 = arith.constant 0 : index
    %0 = vector.load %arg2[%c0, %c0_0] : memref<64x12xbf16, #tpu.memory_space<vmem>>, vector<64x12xbf16>
    %c0_1 = arith.constant 0 : index
    %c0_2 = arith.constant 0 : index
    %1 = vector.load %arg1[%c0_1, %c0_2] : memref<12x398xbf16, #tpu.memory_space<vmem>>, vector<12x398xbf16>
    %cst = arith.constant dense<0.000000e+00> : vector<64x398xf32>
    %2 = tpu.matmul %0, %1, %cst {dimension_numbers = #tpu.dot_dimension_numbers<[1], [0], [0], [1], [0, 0, 1, 1], [], []>} : vector<64x12xbf16>, vector<12x398xbf16>, vector<64x398xf32> -> vector<64x398xf32>
    %3 = vector.extract_strided_slice %2 {offsets = [0, 0], sizes = [25, 398], strides = [1, 1]} : vector<64x398xf32> to vector<25x398xf32>
    %4 = vector.extract_strided_slice %2 {offsets = [32, 0], sizes = [25, 398], strides = [1, 1]} : vector<64x398xf32> to vector<25x398xf32>
    %5 = arith.maximumf %3, %4 : vector<25x398xf32>
    %c0_3 = arith.constant 0 : index
    %c0_4 = arith.constant 0 : index
    %6 = vector.load %arg3[%c0_3, %c0_4] : memref<25x1xf32, #tpu.memory_space<vmem>>, vector<25x1xf32>
    %7 = vector.broadcast %6 : vector<25x1xf32> to vector<25x398xf32>
    %8 = arith.addf %5, %7 : vector<25x398xf32>
    %cst_5 = arith.constant 0.000000e+00 : f32
    %9 = vector.broadcast %cst_5 : f32 to vector<25x398xf32>
    %10 = arith.cmpf ogt, %8, %9 : vector<25x398xf32>
    %cst_6 = arith.constant 0.000000e+00 : f32
    %11 = vector.broadcast %cst_6 : f32 to vector<25x398xf32>
    %12 = arith.minimumf %8, %11 : vector<25x398xf32>
    %13 = math.exp %12 : vector<25x398xf32>
    %cst_7 = arith.constant 1.000000e+00 : f32
    %14 = vector.broadcast %cst_7 : f32 to vector<25x398xf32>
    %15 = arith.subf %13, %14 : vector<25x398xf32>
    %16 = arith.select %10, %8, %15 : vector<25x398xi1>, vector<25x398xf32>
    %17 = arith.truncf %16 : vector<25x398xf32> to vector<25x398xbf16>
    %c0_8 = arith.constant 0 : index
    %c0_9 = arith.constant 0 : index
    %18 = vector.load %arg4[%c0_8, %c0_9] : memref<25x398xbf16, #tpu.memory_space<vmem>>, vector<25x398xbf16>
    tpu.vector_store %arg4[%c0_8, %c0_9], %17 {strides = array<i32>} : memref<25x398xbf16, #tpu.memory_space<vmem>>, vector<25x398xbf16>,
    return
  }
  func.func @transform_0(%arg0: i32) -> (i32, i32) {
    %c0_i32 = arith.constant 0 : i32
    %c0_i32_0 = arith.constant 0 : i32
    return %c0_i32, %arg0 : i32, i32
  }
  func.func @transform_1(%arg0: i32) -> (i32, i32) {
    %c0_i32 = arith.constant 0 : i32
    %c0_i32_0 = arith.constant 0 : i32
    %c0_i32_1 = arith.constant 0 : i32
    return %c0_i32, %c0_i32_0 : i32, i32
  }
  func.func @transform_2(%arg0: i32) -> (i32, i32) {
    %c0_i32 = arith.constant 0 : i32
    %c0_i32_0 = arith.constant 0 : i32
    %c0_i32_1 = arith.constant 0 : i32
    return %c0_i32, %c0_i32_0 : i32, i32
  }
  func.func @transform_3(%arg0: i32) -> (i32, i32) {
    %c0_i32 = arith.constant 0 : i32
    %c0_i32_0 = arith.constant 0 : i32
    return %c0_i32, %arg0 : i32, i32
  }
}

module attributes {stable_mosaic.version = 11 : i64} {
  func.func @_conv_pool_kernel(%arg0: i32, %arg1: memref<2x52x125xbf16, #tpu.memory_space<vmem>>, %arg2: memref<125x50xbf16, #tpu.memory_space<vmem>>, %arg3: memref<1x50xf32, #tpu.memory_space<vmem>>, %arg4: memref<52x50xbf16, #tpu.memory_space<vmem>>) attributes {dimension_semantics = [#tpu.dimension_semantics<parallel>], iteration_bounds = array<i64: 1>, scalar_prefetch = 0 : i64, scratch_operands = 0 : i64, tpu.core_type = #tpu.core_type<tc>, window_params = [{transform_indices = @transform_0, window_bounds = array<i64: 2, 52, 125>}, {pipeline_mode = #tpu.pipeline_mode<synchronous>, transform_indices = @transform_1, window_bounds = array<i64: 125, 50>}, {pipeline_mode = #tpu.pipeline_mode<synchronous>, transform_indices = @transform_2, window_bounds = array<i64: 1, 50>}, {transform_indices = @transform_3, window_bounds = array<i64: 52, 50>}]} {
    %c0 = arith.constant 0 : index
    %c0_0 = arith.constant 0 : index
    %c0_1 = arith.constant 0 : index
    %0 = vector.load %arg1[%c0, %c0_0, %c0_1] : memref<2x52x125xbf16, #tpu.memory_space<vmem>>, vector<1x52x125xbf16>
    %1 = vector.shape_cast %0 : vector<1x52x125xbf16> to vector<52x125xbf16>
    %c1 = arith.constant 1 : index
    %c0_2 = arith.constant 0 : index
    %c0_3 = arith.constant 0 : index
    %2 = vector.load %arg1[%c1, %c0_2, %c0_3] : memref<2x52x125xbf16, #tpu.memory_space<vmem>>, vector<1x52x125xbf16>
    %3 = vector.shape_cast %2 : vector<1x52x125xbf16> to vector<52x125xbf16>
    %4 = tpu.concatenate %1, %3 in 0 : vector<52x125xbf16>, vector<52x125xbf16> -> vector<104x125xbf16>
    %c0_4 = arith.constant 0 : index
    %c0_5 = arith.constant 0 : index
    %5 = vector.load %arg2[%c0_4, %c0_5] : memref<125x50xbf16, #tpu.memory_space<vmem>>, vector<125x50xbf16>
    %cst = arith.constant dense<0.000000e+00> : vector<104x50xf32>
    %6 = tpu.matmul %4, %5, %cst {dimension_numbers = #tpu.dot_dimension_numbers<[1], [0], [0], [1], [0, 0, 1, 1], [], []>} : vector<104x125xbf16>, vector<125x50xbf16>, vector<104x50xf32> -> vector<104x50xf32>
    %7 = vector.extract_strided_slice %6 {offsets = [0, 0], sizes = [52, 50], strides = [1, 1]} : vector<104x50xf32> to vector<52x50xf32>
    %8 = vector.extract_strided_slice %6 {offsets = [52, 0], sizes = [52, 50], strides = [1, 1]} : vector<104x50xf32> to vector<52x50xf32>
    %9 = arith.maximumf %7, %8 : vector<52x50xf32>
    %c0_6 = arith.constant 0 : index
    %c0_7 = arith.constant 0 : index
    %10 = vector.load %arg3[%c0_6, %c0_7] : memref<1x50xf32, #tpu.memory_space<vmem>>, vector<1x50xf32>
    %11 = vector.broadcast %10 : vector<1x50xf32> to vector<52x50xf32>
    %12 = arith.addf %9, %11 : vector<52x50xf32>
    %cst_8 = arith.constant 0.000000e+00 : f32
    %13 = vector.broadcast %cst_8 : f32 to vector<52x50xf32>
    %14 = arith.cmpf ogt, %12, %13 : vector<52x50xf32>
    %cst_9 = arith.constant 0.000000e+00 : f32
    %15 = vector.broadcast %cst_9 : f32 to vector<52x50xf32>
    %16 = arith.minimumf %12, %15 : vector<52x50xf32>
    %17 = math.exp %16 : vector<52x50xf32>
    %cst_10 = arith.constant 1.000000e+00 : f32
    %18 = vector.broadcast %cst_10 : f32 to vector<52x50xf32>
    %19 = arith.subf %17, %18 : vector<52x50xf32>
    %20 = arith.select %14, %12, %19 : vector<52x50xi1>, vector<52x50xf32>
    %21 = arith.truncf %20 : vector<52x50xf32> to vector<52x50xbf16>
    %c0_11 = arith.constant 0 : index
    %c0_12 = arith.constant 0 : index
    %22 = vector.load %arg4[%c0_11, %c0_12] : memref<52x50xbf16, #tpu.memory_space<vmem>>, vector<52x50xbf16>
    tpu.vector_store %arg4[%c0_11, %c0_12], %21 {strides = array<i32>} : memref<52x50xbf16, #tpu.memory_space<vmem>>, vector<52x50xbf16>,
    return
  }
  func.func @transform_0(%arg0: i32) -> (i32, i32, i32) {
    %c0_i32 = arith.constant 0 : i32
    %c0_i32_0 = arith.constant 0 : i32
    %c0_i32_1 = arith.constant 0 : i32
    return %c0_i32, %arg0, %c0_i32_0 : i32, i32, i32
  }
  func.func @transform_1(%arg0: i32) -> (i32, i32) {
    %c0_i32 = arith.constant 0 : i32
    %c0_i32_0 = arith.constant 0 : i32
    %c0_i32_1 = arith.constant 0 : i32
    return %c0_i32, %c0_i32_0 : i32, i32
  }
  func.func @transform_2(%arg0: i32) -> (i32, i32) {
    %c0_i32 = arith.constant 0 : i32
    %c0_i32_0 = arith.constant 0 : i32
    %c0_i32_1 = arith.constant 0 : i32
    return %c0_i32, %c0_i32_0 : i32, i32
  }
  func.func @transform_3(%arg0: i32) -> (i32, i32) {
    %c0_i32 = arith.constant 0 : i32
    %c0_i32_0 = arith.constant 0 : i32
    return %arg0, %c0_i32 : i32, i32
  }
}

module attributes {stable_mosaic.version = 11 : i64} {
  func.func @_conv_pool_kernel(%arg0: i32, %arg1: memref<2x10x250xbf16, #tpu.memory_space<vmem>>, %arg2: memref<250x100xbf16, #tpu.memory_space<vmem>>, %arg3: memref<1x100xf32, #tpu.memory_space<vmem>>, %arg4: memref<10x100xbf16, #tpu.memory_space<vmem>>) attributes {dimension_semantics = [#tpu.dimension_semantics<parallel>], iteration_bounds = array<i64: 1>, scalar_prefetch = 0 : i64, scratch_operands = 0 : i64, tpu.core_type = #tpu.core_type<tc>, window_params = [{transform_indices = @transform_0, window_bounds = array<i64: 2, 10, 250>}, {pipeline_mode = #tpu.pipeline_mode<synchronous>, transform_indices = @transform_1, window_bounds = array<i64: 250, 100>}, {pipeline_mode = #tpu.pipeline_mode<synchronous>, transform_indices = @transform_2, window_bounds = array<i64: 1, 100>}, {transform_indices = @transform_3, window_bounds = array<i64: 10, 100>}]} {
    %c0 = arith.constant 0 : index
    %c0_0 = arith.constant 0 : index
    %c0_1 = arith.constant 0 : index
    %0 = vector.load %arg1[%c0, %c0_0, %c0_1] : memref<2x10x250xbf16, #tpu.memory_space<vmem>>, vector<1x10x250xbf16>
    %1 = vector.shape_cast %0 : vector<1x10x250xbf16> to vector<10x250xbf16>
    %c1 = arith.constant 1 : index
    %c0_2 = arith.constant 0 : index
    %c0_3 = arith.constant 0 : index
    %2 = vector.load %arg1[%c1, %c0_2, %c0_3] : memref<2x10x250xbf16, #tpu.memory_space<vmem>>, vector<1x10x250xbf16>
    %3 = vector.shape_cast %2 : vector<1x10x250xbf16> to vector<10x250xbf16>
    %4 = tpu.concatenate %1, %3 in 0 : vector<10x250xbf16>, vector<10x250xbf16> -> vector<20x250xbf16>
    %c0_4 = arith.constant 0 : index
    %c0_5 = arith.constant 0 : index
    %5 = vector.load %arg2[%c0_4, %c0_5] : memref<250x100xbf16, #tpu.memory_space<vmem>>, vector<250x100xbf16>
    %cst = arith.constant dense<0.000000e+00> : vector<20x100xf32>
    %6 = tpu.matmul %4, %5, %cst {dimension_numbers = #tpu.dot_dimension_numbers<[1], [0], [0], [1], [0, 0, 1, 1], [], []>} : vector<20x250xbf16>, vector<250x100xbf16>, vector<20x100xf32> -> vector<20x100xf32>
    %7 = vector.extract_strided_slice %6 {offsets = [0, 0], sizes = [10, 100], strides = [1, 1]} : vector<20x100xf32> to vector<10x100xf32>
    %8 = vector.extract_strided_slice %6 {offsets = [10, 0], sizes = [10, 100], strides = [1, 1]} : vector<20x100xf32> to vector<10x100xf32>
    %9 = arith.maximumf %7, %8 : vector<10x100xf32>
    %c0_6 = arith.constant 0 : index
    %c0_7 = arith.constant 0 : index
    %10 = vector.load %arg3[%c0_6, %c0_7] : memref<1x100xf32, #tpu.memory_space<vmem>>, vector<1x100xf32>
    %11 = vector.broadcast %10 : vector<1x100xf32> to vector<10x100xf32>
    %12 = arith.addf %9, %11 : vector<10x100xf32>
    %cst_8 = arith.constant 0.000000e+00 : f32
    %13 = vector.broadcast %cst_8 : f32 to vector<10x100xf32>
    %14 = arith.cmpf ogt, %12, %13 : vector<10x100xf32>
    %cst_9 = arith.constant 0.000000e+00 : f32
    %15 = vector.broadcast %cst_9 : f32 to vector<10x100xf32>
    %16 = arith.minimumf %12, %15 : vector<10x100xf32>
    %17 = math.exp %16 : vector<10x100xf32>
    %cst_10 = arith.constant 1.000000e+00 : f32
    %18 = vector.broadcast %cst_10 : f32 to vector<10x100xf32>
    %19 = arith.subf %17, %18 : vector<10x100xf32>
    %20 = arith.select %14, %12, %19 : vector<10x100xi1>, vector<10x100xf32>
    %21 = arith.truncf %20 : vector<10x100xf32> to vector<10x100xbf16>
    %c0_11 = arith.constant 0 : index
    %c0_12 = arith.constant 0 : index
    %22 = vector.load %arg4[%c0_11, %c0_12] : memref<10x100xbf16, #tpu.memory_space<vmem>>, vector<10x100xbf16>
    tpu.vector_store %arg4[%c0_11, %c0_12], %21 {strides = array<i32>} : memref<10x100xbf16, #tpu.memory_space<vmem>>, vector<10x100xbf16>,
    return
  }
  func.func @transform_0(%arg0: i32) -> (i32, i32, i32) {
    %c0_i32 = arith.constant 0 : i32
    %c0_i32_0 = arith.constant 0 : i32
    %c0_i32_1 = arith.constant 0 : i32
    return %c0_i32, %arg0, %c0_i32_0 : i32, i32, i32
  }
  func.func @transform_1(%arg0: i32) -> (i32, i32) {
    %c0_i32 = arith.constant 0 : i32
    %c0_i32_0 = arith.constant 0 : i32
    %c0_i32_1 = arith.constant 0 : i32
    return %c0_i32, %c0_i32_0 : i32, i32
  }
  func.func @transform_2(%arg0: i32) -> (i32, i32) {
    %c0_i32 = arith.constant 0 : i32
    %c0_i32_0 = arith.constant 0 : i32
    %c0_i32_1 = arith.constant 0 : i32
    return %c0_i32, %c0_i32_0 : i32, i32
  }
  func.func @transform_3(%arg0: i32) -> (i32, i32) {
    %c0_i32 = arith.constant 0 : i32
    %c0_i32_0 = arith.constant 0 : i32
    return %arg0, %c0_i32 : i32, i32
  }
}

module attributes {stable_mosaic.version = 11 : i64} {
  func.func @_conv_pool_kernel(%arg0: i32, %arg1: memref<2x4x500xbf16, #tpu.memory_space<vmem>>, %arg2: memref<500x200xbf16, #tpu.memory_space<vmem>>, %arg3: memref<1x200xf32, #tpu.memory_space<vmem>>, %arg4: memref<4x200xbf16, #tpu.memory_space<vmem>>) attributes {dimension_semantics = [#tpu.dimension_semantics<parallel>], iteration_bounds = array<i64: 1>, scalar_prefetch = 0 : i64, scratch_operands = 0 : i64, tpu.core_type = #tpu.core_type<tc>, window_params = [{transform_indices = @transform_0, window_bounds = array<i64: 2, 4, 500>}, {pipeline_mode = #tpu.pipeline_mode<synchronous>, transform_indices = @transform_1, window_bounds = array<i64: 500, 200>}, {pipeline_mode = #tpu.pipeline_mode<synchronous>, transform_indices = @transform_2, window_bounds = array<i64: 1, 200>}, {transform_indices = @transform_3, window_bounds = array<i64: 4, 200>}]} {
    %c0 = arith.constant 0 : index
    %c0_0 = arith.constant 0 : index
    %c0_1 = arith.constant 0 : index
    %0 = vector.load %arg1[%c0, %c0_0, %c0_1] : memref<2x4x500xbf16, #tpu.memory_space<vmem>>, vector<1x4x500xbf16>
    %1 = vector.shape_cast %0 : vector<1x4x500xbf16> to vector<4x500xbf16>
    %c1 = arith.constant 1 : index
    %c0_2 = arith.constant 0 : index
    %c0_3 = arith.constant 0 : index
    %2 = vector.load %arg1[%c1, %c0_2, %c0_3] : memref<2x4x500xbf16, #tpu.memory_space<vmem>>, vector<1x4x500xbf16>
    %3 = vector.shape_cast %2 : vector<1x4x500xbf16> to vector<4x500xbf16>
    %4 = tpu.concatenate %1, %3 in 0 : vector<4x500xbf16>, vector<4x500xbf16> -> vector<8x500xbf16>
    %c0_4 = arith.constant 0 : index
    %c0_5 = arith.constant 0 : index
    %5 = vector.load %arg2[%c0_4, %c0_5] : memref<500x200xbf16, #tpu.memory_space<vmem>>, vector<500x200xbf16>
    %cst = arith.constant dense<0.000000e+00> : vector<8x200xf32>
    %6 = tpu.matmul %4, %5, %cst {dimension_numbers = #tpu.dot_dimension_numbers<[1], [0], [0], [1], [0, 0, 1, 1], [], []>} : vector<8x500xbf16>, vector<500x200xbf16>, vector<8x200xf32> -> vector<8x200xf32>
    %7 = vector.extract_strided_slice %6 {offsets = [0, 0], sizes = [4, 200], strides = [1, 1]} : vector<8x200xf32> to vector<4x200xf32>
    %8 = vector.extract_strided_slice %6 {offsets = [4, 0], sizes = [4, 200], strides = [1, 1]} : vector<8x200xf32> to vector<4x200xf32>
    %9 = arith.maximumf %7, %8 : vector<4x200xf32>
    %c0_6 = arith.constant 0 : index
    %c0_7 = arith.constant 0 : index
    %10 = vector.load %arg3[%c0_6, %c0_7] : memref<1x200xf32, #tpu.memory_space<vmem>>, vector<1x200xf32>
    %11 = vector.broadcast %10 : vector<1x200xf32> to vector<4x200xf32>
    %12 = arith.addf %9, %11 : vector<4x200xf32>
    %cst_8 = arith.constant 0.000000e+00 : f32
    %13 = vector.broadcast %cst_8 : f32 to vector<4x200xf32>
    %14 = arith.cmpf ogt, %12, %13 : vector<4x200xf32>
    %cst_9 = arith.constant 0.000000e+00 : f32
    %15 = vector.broadcast %cst_9 : f32 to vector<4x200xf32>
    %16 = arith.minimumf %12, %15 : vector<4x200xf32>
    %17 = math.exp %16 : vector<4x200xf32>
    %cst_10 = arith.constant 1.000000e+00 : f32
    %18 = vector.broadcast %cst_10 : f32 to vector<4x200xf32>
    %19 = arith.subf %17, %18 : vector<4x200xf32>
    %20 = arith.select %14, %12, %19 : vector<4x200xi1>, vector<4x200xf32>
    %21 = arith.truncf %20 : vector<4x200xf32> to vector<4x200xbf16>
    %c0_11 = arith.constant 0 : index
    %c0_12 = arith.constant 0 : index
    %22 = vector.load %arg4[%c0_11, %c0_12] : memref<4x200xbf16, #tpu.memory_space<vmem>>, vector<4x200xbf16>
    tpu.vector_store %arg4[%c0_11, %c0_12], %21 {strides = array<i32>} : memref<4x200xbf16, #tpu.memory_space<vmem>>, vector<4x200xbf16>,
    return
  }
  func.func @transform_0(%arg0: i32) -> (i32, i32, i32) {
    %c0_i32 = arith.constant 0 : i32
    %c0_i32_0 = arith.constant 0 : i32
    %c0_i32_1 = arith.constant 0 : i32
    return %c0_i32, %arg0, %c0_i32_0 : i32, i32, i32
  }
  func.func @transform_1(%arg0: i32) -> (i32, i32) {
    %c0_i32 = arith.constant 0 : i32
    %c0_i32_0 = arith.constant 0 : i32
    %c0_i32_1 = arith.constant 0 : i32
    return %c0_i32, %c0_i32_0 : i32, i32
  }
  func.func @transform_2(%arg0: i32) -> (i32, i32) {
    %c0_i32 = arith.constant 0 : i32
    %c0_i32_0 = arith.constant 0 : i32
    %c0_i32_1 = arith.constant 0 : i32
    return %c0_i32, %c0_i32_0 : i32, i32
  }
  func.func @transform_3(%arg0: i32) -> (i32, i32) {
    %c0_i32 = arith.constant 0 : i32
    %c0_i32_0 = arith.constant 0 : i32
    return %arg0, %c0_i32 : i32, i32
  }
}

</mosaic_0001>

<llo_original>
// kernel: deep_conv_net_forward.4
$region0: #{deep_conv_net_forward.4}
  #allocation0 [shape = 'u32[]', space=smem, size = 0x4, offset = 0x4, fixed_abs, tag = 'smem constant byte address 0x4 - core index']
  #allocation1 [shape = 'u32[144,128]{1,0:T(1,128)}', space=vmem, size = 0x12000, scoped, tag = 'internal scratch']
  %s0 = inlined_call_operand.vmem [shape: bf16[12,398], index: 0, kind: input, shape index: {}]
  %s1 = inlined_call_operand.vmem [shape: bf16[64,12], index: 1, kind: input, shape index: {}]
  %s2 = inlined_call_operand.vmem [shape: f32[25,1], index: 2, kind: input, shape index: {}]
  %s3 = inlined_call_operand.vmem [shape: bf16[25,398], index: 3, kind: output, shape index: {}]
  %s4 = sld [smem:[#allocation0]]
  $region22: #{deep_conv_net_forward.4} parent=0
    _
  %s6 = ssub.s32 1, %s4
  %s7 = scalar_select 0, %s6, %s4
  // Predicated region
  $region2: #{deep_conv_net_forward.4} parent=0 // pred_check
    _
  $region3: #{deep_conv_net_forward.4} parent=0 // pred_check_branch
    %9 = sbr.rel (0) target = $region5
  $region4: #{deep_conv_net_forward.4} parent=0 // pred_region
    _
  $region5: #{deep_conv_net_forward.4} parent=0 // pred_fallthru
    _
  // Predicated region
  $region6: #{deep_conv_net_forward.4} parent=0 // pred_check
    _
  $region7: #{deep_conv_net_forward.4} parent=0 // pred_check_branch
    %11 = sbr.rel (0) target = $region9
  $region8: #{deep_conv_net_forward.4} parent=0 // pred_region
    _
  $region9: #{deep_conv_net_forward.4} parent=0 // pred_fallthru
    _
  // Predicated region
  $region10: #{deep_conv_net_forward.4} parent=0 // pred_check
    _
  $region11: #{deep_conv_net_forward.4} parent=0 // pred_check_branch
    %13 = sbr.rel (0) target = $region13
  $region12: #{deep_conv_net_forward.4} parent=0 // pred_region
    _
  $region13: #{deep_conv_net_forward.4} parent=0 // pred_fallthru
    _
  %v15 = vld [vmem:[%s1] sm:$0xf]
  %v16 = vld [vmem:[%s1 + $0x4] sm:$0xf]
  %v17 = vld [vmem:[%s1 + $0x8] sm:$0xf]
  %v18 = vld [vmem:[%s1 + $0xc] sm:$0xf]
  %v19 = vld [vmem:[%s1 + $0x10] sm:$0xf]
  %v20 = vld [vmem:[%s1 + $0x14] sm:$0xf]
  %v21 = vld [vmem:[%s1 + $0x18] sm:$0xf]
  %v22 = vld [vmem:[%s1 + $0x1c] sm:$0xf]
  %v23 = vld [vmem:[%s0] sm:$0xff]
  %v24 = vld [vmem:[%s0 + $0x8] sm:$0xff]
  %v25 = vld [vmem:[%s0 + $0x10] sm:$0x33]
  %v26 = vld [vmem:[%s0 + $0x18] sm:$0x33]
  %v35 = vunpack.c.l.b16 %v15
  %v36 = vunpack.c.l.b16 %v16
  %v37 = vunpack.c.l.b16 %v17
  %v38 = vunpack.c.l.b16 %v18
  %v39 = vunpack.c.l.b16 %v19
  %v40 = vunpack.c.l.b16 %v20
  %v41 = vunpack.c.l.b16 %v21
  %v42 = vunpack.c.l.b16 %v22
  %v43 = vpack.c.b16 %v36, %v35
  %v44 = vpack.c.b16 %v38, %v37
  %v45 = vpack.c.b16 %v40, %v39
  %v46 = vpack.c.b16 %v42, %v41
  %v51 = vunpack.c.l.b16 %v23
  %v52 = vunpack.c.h.b16 %v23
  %v53 = vunpack.c.l.b16 %v24
  %v54 = vunpack.c.h.b16 %v24
  %v55 = vunpack.c.l.b16 %v25
  %v56 = vunpack.c.h.b16 %v25
  %v57 = vunpack.c.l.b16 %v26
  %v58 = vunpack.c.h.b16 %v26
  %v59 = vpack.c.b16 %v55, %v51
  %v60 = vpack.c.b16 %v56, %v52
  %v61 = vpack.c.b16 %v57, %v53
  %v62 = vpack.c.b16 %v58, %v54
  %vm63 = vcmask 97280
  %v65 = vsel %vm63, %v43, 0
  %v68 = vsel %vm63, %v44, 0
  %v71 = vsel %vm63, %v45, 0
  %v74 = vsel %vm63, %v46, 0
  %vm76 = vcmask 1045504
  %v78 = vsel %vm76, %v59, 0
  %v81 = vsel %vm76, %v60, 0
  %v84 = vsel %vm76, %v61, 0
  %v87 = vsel %vm76, %v62, 0
  %89 = vmatprep.subr.bf16.mxu0 0
  %90 = vmatpush1.bf16.msra.mxu0 0
  %91 = vmatprep.subr.bf16.mxu0 0
  %92 = vmatpush1.bf16.msra.mxu0 0
  %93 = vmatprep.subr.bf16.mxu0 0
  %94 = vmatpush1.bf16.msra.mxu0 0
  %95 = vmatprep.subr.bf16.mxu0 0
  %96 = vmatpush1.bf16.msra.mxu0 0
  %97 = vmatprep.subr.bf16.mxu0 0
  %98 = vmatpush1.bf16.msra.mxu0 0
  %99 = vmatprep.subr.bf16.mxu0 0
  %100 = vmatpush1.bf16.msra.mxu0 0
  %101 = vmatprep.subr.bf16.mxu0 0
  %102 = vmatpush1.bf16.msra.mxu0 0
  %103 = vmatprep.subr.bf16.mxu0 %v81
  %104 = vmatpush1.bf16.msra.mxu0 %v78
  %105 = vmatprep.subr.bf16.mxu0 0
  %106 = vmatpush2.bf16.msra.mxu0 0
  %107 = vmatprep.subr.bf16.mxu0 0
  %108 = vmatpush2.bf16.msra.mxu0 0
  %109 = vmatprep.subr.bf16.mxu0 0
  %110 = vmatpush2.bf16.msra.mxu0 0
  %111 = vmatprep.subr.bf16.mxu0 0
  %112 = vmatpush2.bf16.msra.mxu0 0
  %113 = vmatprep.subr.bf16.mxu0 0
  %114 = vmatpush2.bf16.msra.mxu0 0
  %115 = vmatprep.subr.bf16.mxu0 0
  %116 = vmatpush2.bf16.msra.mxu0 0
  %117 = vmatprep.subr.bf16.mxu0 0
  %118 = vmatpush2.bf16.msra.mxu0 0
  %119 = vmatprep.subr.bf16.mxu0 0
  %120 = vmatpush2.bf16.msra.mxu0 0
  %121 = vmatprep.mubr.bf16.mxu0 0
  %122 = vmatmul.mubr.bf16.gmra.mxu0 %v65
  %v123 = vpop.f32.mrf.mxu0
  %v124 = vadd.f32 0.0, %v123
  %v125 = vpop.f32.mrf.mxu0
  %v126 = vadd.f32 0.0, %v125
  %v127 = vpop.f32.mrf.mxu0
  %v128 = vadd.f32 0.0, %v127
  %v129 = vpop.f32.mrf.mxu0
  %v130 = vadd.f32 0.0, %v129
  %131 = vmatprep.mubr.bf16.mxu0 0
  %132 = vmatmul.mubr.bf16.gmra.mxu0 %v68
  %v133 = vpop.f32.mrf.mxu0
  %v134 = vadd.f32 0.0, %v133
  %v135 = vpop.f32.mrf.mxu0
  %v136 = vadd.f32 0.0, %v135
  %v137 = vpop.f32.mrf.mxu0
  %v138 = vadd.f32 0.0, %v137
  %v139 = vpop.f32.mrf.mxu0
  %v140 = vadd.f32 0.0, %v139
  %141 = vmatprep.mubr.bf16.mxu0 0
  %142 = vmatmul.mubr.bf16.gmra.mxu0 %v71
  %v143 = vpop.f32.mrf.mxu0
  %v144 = vadd.f32 0.0, %v143
  %v145 = vpop.f32.mrf.mxu0
  %v146 = vadd.f32 0.0, %v145
  %v147 = vpop.f32.mrf.mxu0
  %v148 = vadd.f32 0.0, %v147
  %v149 = vpop.f32.mrf.mxu0
  %v150 = vadd.f32 0.0, %v149
  %151 = vmatprep.mubr.bf16.mxu0 0
  %152 = vmatmul.mubr.bf16.gmra.mxu0 %v74
  %v153 = vpop.f32.mrf.mxu0
  %v154 = vadd.f32 0.0, %v153
  %v155 = vpop.f32.mrf.mxu0
  %v156 = vadd.f32 0.0, %v155
  %v157 = vpop.f32.mrf.mxu0
  %v158 = vadd.f32 0.0, %v157
  %v159 = vpop.f32.mrf.mxu0
  %v160 = vadd.f32 0.0, %v159
  %161 = vdwg.mxu0
  %162 = vmatprep.subr.bf16.mxu0 0
  %163 = vmatpush1.bf16.msra.mxu0 0
  %164 = vmatprep.subr.bf16.mxu0 0
  %165 = vmatpush1.bf16.msra.mxu0 0
  %166 = vmatprep.subr.bf16.mxu0 0
  %167 = vmatpush1.bf16.msra.mxu0 0
  %168 = vmatprep.subr.bf16.mxu0 0
  %169 = vmatpush1.bf16.msra.mxu0 0
  %170 = vmatprep.subr.bf16.mxu0 0
  %171 = vmatpush1.bf16.msra.mxu0 0
  %172 = vmatprep.subr.bf16.mxu0 0
  %173 = vmatpush1.bf16.msra.mxu0 0
  %174 = vmatprep.subr.bf16.mxu0 0
  %175 = vmatpush1.bf16.msra.mxu0 0
  %176 = vmatprep.subr.bf16.mxu0 %v87
  %177 = vmatpush1.bf16.msra.mxu0 %v84
  %178 = vmatprep.subr.bf16.mxu0 0
  %179 = vmatpush2.bf16.msra.mxu0 0
  %180 = vmatprep.subr.bf16.mxu0 0
  %181 = vmatpush2.bf16.msra.mxu0 0
  %182 = vmatprep.subr.bf16.mxu0 0
  %183 = vmatpush2.bf16.msra.mxu0 0
  %184 = vmatprep.subr.bf16.mxu0 0
  %185 = vmatpush2.bf16.msra.mxu0 0
  %186 = vmatprep.subr.bf16.mxu0 0
  %187 = vmatpush2.bf16.msra.mxu0 0
  %188 = vmatprep.subr.bf16.mxu0 0
  %189 = vmatpush2.bf16.msra.mxu0 0
  %190 = vmatprep.subr.bf16.mxu0 0
  %191 = vmatpush2.bf16.msra.mxu0 0
  %192 = vmatprep.subr.bf16.mxu0 0
  %193 = vmatpush2.bf16.msra.mxu0 0
  %194 = vmatprep.mubr.bf16.mxu0 0
  %195 = vmatmul.mubr.bf16.gmra.mxu0 %v65
  %v196 = vpop.f32.mrf.mxu0
  %v197 = vadd.f32 0.0, %v196
  %v198 = vpop.f32.mrf.mxu0
  %v199 = vadd.f32 0.0, %v198
  %v200 = vpop.f32.mrf.mxu0
  %v201 = vadd.f32 0.0, %v200
  %v202 = vpop.f32.mrf.mxu0
  %v203 = vadd.f32 0.0, %v202
  %204 = vmatprep.mubr.bf16.mxu0 0
  %205 = vmatmul.mubr.bf16.gmra.mxu0 %v68
  %v206 = vpop.f32.mrf.mxu0
  %v207 = vadd.f32 0.0, %v206
  %v208 = vpop.f32.mrf.mxu0
  %v209 = vadd.f32 0.0, %v208
  %v210 = vpop.f32.mrf.mxu0
  %v211 = vadd.f32 0.0, %v210
  %v212 = vpop.f32.mrf.mxu0
  %v213 = vadd.f32 0.0, %v212
  %214 = vmatprep.mubr.bf16.mxu0 0
  %215 = vmatmul.mubr.bf16.gmra.mxu0 %v71
  %v216 = vpop.f32.mrf.mxu0
  %v217 = vadd.f32 0.0, %v216
  %v218 = vpop.f32.mrf.mxu0
  %v219 = vadd.f32 0.0, %v218
  %v220 = vpop.f32.mrf.mxu0
  %v221 = vadd.f32 0.0, %v220
  %v222 = vpop.f32.mrf.mxu0
  %v223 = vadd.f32 0.0, %v222
  %224 = vmatprep.mubr.bf16.mxu0 0
  %225 = vmatmul.mubr.bf16.gmra.mxu0 %v74
  %v226 = vpop.f32.mrf.mxu0
  %v227 = vadd.f32 0.0, %v226
  %v228 = vpop.f32.mrf.mxu0
  %v229 = vadd.f32 0.0, %v228
  %v230 = vpop.f32.mrf.mxu0
  %v231 = vadd.f32 0.0, %v230
  %v232 = vpop.f32.mrf.mxu0
  %v233 = vadd.f32 0.0, %v232
  %234 = vdwg.mxu0
  %v235 = vmax.f32 %v124, %v144
  %v236 = vmax.f32 %v126, %v146
  %v237 = vmax.f32 %v197, %v217
  %v238 = vmax.f32 %v199, %v219
  %v239 = vmax.f32 %v128, %v148
  %v240 = vmax.f32 %v130, %v150
  %v241 = vmax.f32 %v201, %v221
  %v242 = vmax.f32 %v203, %v223
  %v243 = vmax.f32 %v134, %v154
  %v244 = vmax.f32 %v136, %v156
  %v245 = vmax.f32 %v207, %v227
  %v246 = vmax.f32 %v209, %v229
  %v247 = vmax.f32 %v138, %v158
  %v248 = vmax.f32 %v140, %v160
  %v249 = vmax.f32 %v211, %v231
  %v250 = vmax.f32 %v213, %v233
  %v251 = vld [vmem:[%s2] sm:$0xff]
  %v252 = vld [vmem:[%s2 + $0x8] sm:$0xff]
  %v253 = vld [vmem:[%s2 + $0x10] sm:$0xff]
  %v254 = vld [vmem:[%s2 + $0x18] sm:$0x1]
  %256 = vset.pattern.permute.xlu0 0
  %257 = vperm.xlu0 %256, %v251
  %v258 = vpop.permute.xlu0 %257
  %261 = vset.pattern.permute.xlu0 0
  %262 = vperm.xlu0 %261, %v252
  %v263 = vpop.permute.xlu0 %262
  %266 = vset.pattern.permute.xlu0 0
  %267 = vperm.xlu0 %266, %v253
  %v268 = vpop.permute.xlu0 %267
  %271 = vset.pattern.permute.xlu0 0
  %272 = vperm.xlu0 %271, %v254
  %v273 = vpop.permute.xlu0 %272
  %v275 = vadd.f32 %v235, %v258
  %v276 = vadd.f32 %v236, %v258
  %v277 = vadd.f32 %v237, %v258
  %v278 = vadd.f32 %v238, %v258
  %v279 = vadd.f32 %v239, %v263
  %v280 = vadd.f32 %v240, %v263
  %v281 = vadd.f32 %v241, %v263
  %v282 = vadd.f32 %v242, %v263
  %v283 = vadd.f32 %v243, %v268
  %v284 = vadd.f32 %v244, %v268
  %v285 = vadd.f32 %v245, %v268
  %v286 = vadd.f32 %v246, %v268
  %v287 = vadd.f32 %v247, %v273
  %v288 = vadd.f32 %v248, %v273
  %v289 = vadd.f32 %v249, %v273
  %v290 = vadd.f32 %v250, %v273
  %vm291 = vcmp.gt.f32.partialorder %v275, 0.0
  %vm292 = vcmp.gt.f32.partialorder %v276, 0.0
  %vm293 = vcmp.gt.f32.partialorder %v277, 0.0
  %vm294 = vcmp.gt.f32.partialorder %v278, 0.0
  %vm295 = vcmp.gt.f32.partialorder %v279, 0.0
  %vm296 = vcmp.gt.f32.partialorder %v280, 0.0
  %vm297 = vcmp.gt.f32.partialorder %v281, 0.0
  %vm298 = vcmp.gt.f32.partialorder %v282, 0.0
  %vm299 = vcmp.gt.f32.partialorder %v283, 0.0
  %vm300 = vcmp.gt.f32.partialorder %v284, 0.0
  %vm301 = vcmp.gt.f32.partialorder %v285, 0.0
  %vm302 = vcmp.gt.f32.partialorder %v286, 0.0
  %vm303 = vcmp.gt.f32.partialorder %v287, 0.0
  %vm304 = vcmp.gt.f32.partialorder %v288, 0.0
  %vm305 = vcmp.gt.f32.partialorder %v289, 0.0
  %vm306 = vcmp.gt.f32.partialorder %v290, 0.0
  %v307 = vmin.f32 %v275, 0.0
  %v308 = vmin.f32 %v276, 0.0
  %v309 = vmin.f32 %v277, 0.0
  %v310 = vmin.f32 %v278, 0.0
  %v311 = vmin.f32 %v279, 0.0
  %v312 = vmin.f32 %v280, 0.0
  %v313 = vmin.f32 %v281, 0.0
  %v314 = vmin.f32 %v282, 0.0
  %v315 = vmin.f32 %v283, 0.0
  %v316 = vmin.f32 %v284, 0.0
  %v317 = vmin.f32 %v285, 0.0
  %v318 = vmin.f32 %v286, 0.0
  %v319 = vmin.f32 %v287, 0.0
  %v320 = vmin.f32 %v288, 0.0
  %v321 = vmin.f32 %v289, 0.0
  %v322 = vmin.f32 %v290, 0.0
  %v323 = vmul.f32 %v307, 1.442695
  %v324 = vpow.pop %v323
  %v325 = vmul.f32 %v308, 1.442695
  %v326 = vpow.pop %v325
  %v327 = vmul.f32 %v309, 1.442695
  %v328 = vpow.pop %v327
  %v329 = vmul.f32 %v310, 1.442695
  %v330 = vpow.pop %v329
  %v331 = vmul.f32 %v311, 1.442695
  %v332 = vpow.pop %v331
  %v333 = vmul.f32 %v312, 1.442695
  %v334 = vpow.pop %v333
  %v335 = vmul.f32 %v313, 1.442695
  %v336 = vpow.pop %v335
  %v337 = vmul.f32 %v314, 1.442695
  %v338 = vpow.pop %v337
  %v339 = vmul.f32 %v315, 1.442695
  %v340 = vpow.pop %v339
  %v341 = vmul.f32 %v316, 1.442695
  %v342 = vpow.pop %v341
  %v343 = vmul.f32 %v317, 1.442695
  %v344 = vpow.pop %v343
  %v345 = vmul.f32 %v318, 1.442695
  %v346 = vpow.pop %v345
  %v347 = vmul.f32 %v319, 1.442695
  %v348 = vpow.pop %v347
  %v349 = vmul.f32 %v320, 1.442695
  %v350 = vpow.pop %v349
  %v351 = vmul.f32 %v321, 1.442695
  %v352 = vpow.pop %v351
  %v353 = vmul.f32 %v322, 1.442695
  %v354 = vpow.pop %v353
  %v355 = vsub.f32 %v324, 1.0
  %v356 = vsub.f32 %v326, 1.0
  %v357 = vsub.f32 %v328, 1.0
  %v358 = vsub.f32 %v330, 1.0
  %v359 = vsub.f32 %v332, 1.0
  %v360 = vsub.f32 %v334, 1.0
  %v361 = vsub.f32 %v336, 1.0
  %v362 = vsub.f32 %v338, 1.0
  %v363 = vsub.f32 %v340, 1.0
  %v364 = vsub.f32 %v342, 1.0
  %v365 = vsub.f32 %v344, 1.0
  %v366 = vsub.f32 %v346, 1.0
  %v367 = vsub.f32 %v348, 1.0
  %v368 = vsub.f32 %v350, 1.0
  %v369 = vsub.f32 %v352, 1.0
  %v370 = vsub.f32 %v354, 1.0
  %v371 = vsel %vm291, %v275, %v355
  %v372 = vsel %vm292, %v276, %v356
  %v373 = vsel %vm293, %v277, %v357
  %v374 = vsel %vm294, %v278, %v358
  %v375 = vsel %vm295, %v279, %v359
  %v376 = vsel %vm296, %v280, %v360
  %v377 = vsel %vm297, %v281, %v361
  %v378 = vsel %vm298, %v282, %v362
  %v379 = vsel %vm299, %v283, %v363
  %v380 = vsel %vm300, %v284, %v364
  %v381 = vsel %vm301, %v285, %v365
  %v382 = vsel %vm302, %v286, %v366
  %v383 = vsel %vm303, %v287, %v367
  %v384 = vsel %vm304, %v288, %v368
  %v385 = vsel %vm305, %v289, %v369
  %v386 = vsel %vm306, %v290, %v370
  %v387 = vpack.c.bf16 %v375, %v371
  %v388 = vpack.c.bf16 %v376, %v372
  %v389 = vpack.c.bf16 %v377, %v373
  %v390 = vpack.c.bf16 %v378, %v374
  %v391 = vpack.c.bf16 %v383, %v379
  %v392 = vpack.c.bf16 %v384, %v380
  %v393 = vpack.c.bf16 %v385, %v381
  %v394 = vpack.c.bf16 %v386, %v382
  %v403 = vunpack.c.l.b16 %v387
  %v404 = vunpack.c.l.b16 %v388
  %v405 = vunpack.c.l.b16 %v389
  %v406 = vunpack.c.l.b16 %v390
  %v407 = vunpack.c.h.b16 %v387
  %v408 = vunpack.c.h.b16 %v388
  %v409 = vunpack.c.h.b16 %v389
  %v410 = vunpack.c.h.b16 %v390
  %v411 = vunpack.c.l.b16 %v391
  %v412 = vunpack.c.l.b16 %v392
  %v413 = vunpack.c.l.b16 %v393
  %v414 = vunpack.c.l.b16 %v394
  %v415 = vunpack.c.h.b16 %v391
  %v416 = vunpack.c.h.b16 %v392
  %v417 = vunpack.c.h.b16 %v393
  %v418 = vunpack.c.h.b16 %v394
  %v419 = vpack.c.b16 %v404, %v403
  %v420 = vpack.c.b16 %v406, %v405
  %v421 = vpack.c.b16 %v408, %v407
  %v422 = vpack.c.b16 %v410, %v409
  %v423 = vpack.c.b16 %v412, %v411
  %v424 = vpack.c.b16 %v414, %v413
  %v425 = vpack.c.b16 %v416, %v415
  %v426 = vpack.c.b16 %v418, %v417
  %435 = vst [vmem:[%s3] sm:$0xff] %v419
  %vm436 = vcmask 1043456
  %vm437 = vcmask 113668
  %vm438 = vmor %vm437, %vm436
  %439 = vst.msk [vmem:[%s3 + $0x8] sm:$0xff] %vm438, %v420
  %440 = vst [vmem:[%s3 + $0x10] sm:$0xff] %v421
  %441 = vst.msk [vmem:[%s3 + $0x18] sm:$0xff] %vm438, %v422
  %442 = vst [vmem:[%s3 + $0x20] sm:$0xff] %v423
  %443 = vst.msk [vmem:[%s3 + $0x28] sm:$0xff] %vm438, %v424
  %vm444 = vcmask 1040384
  %vm445 = vsmask.f32 256
  %vm446 = vmand %vm444, %vm445
  %vm447 = vcmask 1044484
  %vm448 = vsmask.f32 4352
  %vm449 = vmand %vm447, %vm448
  %vm450 = vmor %vm449, %vm446
  %v451 = vld [vmem:[%s3 + $0x30] sm:$0x11]
  %v452 = vsel %vm450, %v425, %v451
  %453 = vst [vmem:[%s3 + $0x30] sm:$0x11] %v452
  %vm454 = vcmask 110596
  %vm455 = vmand %vm454, %vm448
  %vm456 = vmor %vm455, %vm446
  %v457 = vld [vmem:[%s3 + $0x38] sm:$0x11]
  %v458 = vsel %vm456, %v426, %v457
  %459 = vst [vmem:[%s3 + $0x38] sm:$0x11] %v458
  // Predicated region
  $region14: #{deep_conv_net_forward.4} parent=0 // pred_check
    _
  $region15: #{deep_conv_net_forward.4} parent=0 // pred_check_branch
    %461 = sbr.rel (0) target = $region17
  $region16: #{deep_conv_net_forward.4} parent=0 // pred_region
    _
  $region17: #{deep_conv_net_forward.4} parent=0 // pred_fallthru
    _
  // Predicated region
  $region18: #{deep_conv_net_forward.4} parent=0 // pred_check
    _
  $region19: #{deep_conv_net_forward.4} parent=0 // pred_check_branch
    %463 = sbr.rel (0) target = $region21
  $region20: #{deep_conv_net_forward.4} parent=0 // pred_region
    _
  $region21: #{deep_conv_net_forward.4} parent=0 // pred_fallthru
    _

// kernel: deep_conv_net_forward.5
$region0: #{deep_conv_net_forward.5}
  #allocation0 [shape = 'u32[]', space=smem, size = 0x4, offset = 0x4, fixed_abs, tag = 'smem constant byte address 0x4 - core index']
  #allocation1 [shape = 'u32[144,128]{1,0:T(1,128)}', space=vmem, size = 0x12000, scoped, tag = 'internal scratch']
  %s0 = inlined_call_operand.vmem [shape: bf16[2,52,125], index: 0, kind: input, shape index: {}]
  %s1 = inlined_call_operand.vmem [shape: bf16[125,50], index: 1, kind: input, shape index: {}]
  %s2 = inlined_call_operand.vmem [shape: f32[1,50], index: 2, kind: input, shape index: {}]
  %s3 = inlined_call_operand.vmem [shape: bf16[52,50], index: 3, kind: output, shape index: {}]
  %s4 = sld [smem:[#allocation0]]
  $region22: #{deep_conv_net_forward.5} parent=0
    _
  %s6 = ssub.s32 1, %s4
  %s7 = scalar_select 0, %s6, %s4
  // Predicated region
  $region2: #{deep_conv_net_forward.5} parent=0 // pred_check
    _
  $region3: #{deep_conv_net_forward.5} parent=0 // pred_check_branch
    %9 = sbr.rel (0) target = $region5
  $region4: #{deep_conv_net_forward.5} parent=0 // pred_region
    _
  $region5: #{deep_conv_net_forward.5} parent=0 // pred_fallthru
    _
  // Predicated region
  $region6: #{deep_conv_net_forward.5} parent=0 // pred_check
    _
  $region7: #{deep_conv_net_forward.5} parent=0 // pred_check_branch
    %11 = sbr.rel (0) target = $region9
  $region8: #{deep_conv_net_forward.5} parent=0 // pred_region
    _
  $region9: #{deep_conv_net_forward.5} parent=0 // pred_fallthru
    _
  // Predicated region
  $region10: #{deep_conv_net_forward.5} parent=0 // pred_check
    _
  $region11: #{deep_conv_net_forward.5} parent=0 // pred_check_branch
    %13 = sbr.rel (0) target = $region13
  $region12: #{deep_conv_net_forward.5} parent=0 // pred_region
    _
  $region13: #{deep_conv_net_forward.5} parent=0 // pred_fallthru
    _
  %v15 = vld [vmem:[%s0] sm:$0xf]
  %v16 = vld [vmem:[%s0 + $0x4] sm:$0xf]
  %v17 = vld [vmem:[%s0 + $0x8] sm:$0xf]
  %v18 = vld [vmem:[%s0 + $0xc] sm:$0xf]
  %v19 = vld [vmem:[%s0 + $0x10] sm:$0xf]
  %v20 = vld [vmem:[%s0 + $0x14] sm:$0xf]
  %v21 = vld [vmem:[%s0 + $0x18] sm:$0x3]
  %s22 = scalar_lea.vmem %s0, 28
  %v23 = vld [vmem:[%s22] sm:$0xf]
  %v24 = vld [vmem:[%s22 + $0x4] sm:$0xf]
  %v25 = vld [vmem:[%s22 + $0x8] sm:$0xf]
  %v26 = vld [vmem:[%s22 + $0xc] sm:$0xf]
  %v27 = vld [vmem:[%s22 + $0x10] sm:$0xf]
  %v28 = vld [vmem:[%s22 + $0x14] sm:$0xf]
  %v29 = vld [vmem:[%s22 + $0x18] sm:$0x3]
  %v37 = vunpack.c.l.b16 %v15
  %v38 = vunpack.c.l.b16 %v16
  %v39 = vunpack.c.l.b16 %v17
  %v40 = vunpack.c.l.b16 %v18
  %v41 = vunpack.c.l.b16 %v19
  %v42 = vunpack.c.l.b16 %v20
  %v43 = vunpack.c.l.b16 %v21
  %v44 = vpack.c.b16 %v38, %v37
  %v45 = vpack.c.b16 %v40, %v39
  %v46 = vpack.c.b16 %v42, %v41
  %v47 = vpack.c.b16 %v43, %v43
  %v55 = vunpack.c.l.b16 %v23
  %v56 = vunpack.c.l.b16 %v24
  %v57 = vunpack.c.l.b16 %v25
  %v58 = vunpack.c.l.b16 %v26
  %v59 = vunpack.c.l.b16 %v27
  %v60 = vunpack.c.l.b16 %v28
  %v61 = vunpack.c.l.b16 %v29
  %v62 = vpack.c.b16 %v56, %v55
  %v63 = vpack.c.b16 %v58, %v57
  %v64 = vpack.c.b16 %v60, %v59
  %v65 = vpack.c.b16 %v61, %v61
  %vm66 = vcmask 1041408
  %v67 = vrot.slane %v62, 6
  %v68 = vrot.slane %v63, 6
  %v69 = vsel %vm66, %v67, %v68
  %v70 = vrot.slane %v64, 6
  %v71 = vsel %vm66, %v68, %v70
  %v72 = vrot.slane %v65, 6
  %v73 = vsel %vm66, %v70, %v72
  %vm74 = vcmask 1041408
  %v77 = vsel %vm74, %v47, %v67
  %v78 = vld [vmem:[%s1] sm:$0xf]
  %v79 = vld [vmem:[%s1 + $0x4] sm:$0xf]
  %v80 = vld [vmem:[%s1 + $0x8] sm:$0xf]
  %v81 = vld [vmem:[%s1 + $0xc] sm:$0xf]
  %v82 = vld [vmem:[%s1 + $0x10] sm:$0xf]
  %v83 = vld [vmem:[%s1 + $0x14] sm:$0xf]
  %v84 = vld [vmem:[%s1 + $0x18] sm:$0xf]
  %v85 = vld [vmem:[%s1 + $0x1c] sm:$0xf]
  %v86 = vld [vmem:[%s1 + $0x20] sm:$0xf]
  %v87 = vld [vmem:[%s1 + $0x24] sm:$0xf]
  %v88 = vld [vmem:[%s1 + $0x28] sm:$0xf]
  %v89 = vld [vmem:[%s1 + $0x2c] sm:$0xf]
  %v90 = vld [vmem:[%s1 + $0x30] sm:$0xf]
  %v91 = vld [vmem:[%s1 + $0x34] sm:$0xf]
  %v92 = vld [vmem:[%s1 + $0x38] sm:$0xf]
  %v93 = vld [vmem:[%s1 + $0x3c] sm:$0x7]
  %v110 = vunpack.c.l.b16 %v78
  %v111 = vunpack.c.l.b16 %v79
  %v112 = vunpack.c.l.b16 %v80
  %v113 = vunpack.c.l.b16 %v81
  %v114 = vunpack.c.l.b16 %v82
  %v115 = vunpack.c.l.b16 %v83
  %v116 = vunpack.c.l.b16 %v84
  %v117 = vunpack.c.l.b16 %v85
  %v118 = vunpack.c.l.b16 %v86
  %v119 = vunpack.c.l.b16 %v87
  %v120 = vunpack.c.l.b16 %v88
  %v121 = vunpack.c.l.b16 %v89
  %v122 = vunpack.c.l.b16 %v90
  %v123 = vunpack.c.l.b16 %v91
  %v124 = vunpack.c.l.b16 %v92
  %v125 = vunpack.c.l.b16 %v93
  %v126 = vpack.c.b16 %v111, %v110
  %v127 = vpack.c.b16 %v113, %v112
  %v128 = vpack.c.b16 %v115, %v114
  %v129 = vpack.c.b16 %v117, %v116
  %v130 = vpack.c.b16 %v119, %v118
  %v131 = vpack.c.b16 %v121, %v120
  %v132 = vpack.c.b16 %v123, %v122
  %v133 = vpack.c.b16 %v125, %v124
  %vm141 = vcmask 1022976
  %v143 = vsel %vm141, %v44, 0
  %v146 = vsel %vm141, %v45, 0
  %v149 = vsel %vm141, %v46, 0
  %v151 = vsel %vm141, %v77, 0
  %v154 = vsel %vm141, %v69, 0
  %v157 = vsel %vm141, %v71, 0
  %v160 = vsel %vm141, %v73, 0
  %vm162 = vcmask 1045504
  %vm163 = vcmask 1046528
  %v164 = vsel %vm162, 4294967295, 65535
  %v165 = vsel %vm163, %v164, 0
  %v167 = vand.u32 %v133, %v165
  %169 = vmatprep.subr.bf16.mxu0 0
  %170 = vmatpush1.bf16.msra.mxu0 %v167
  %171 = vmatprep.subr.bf16.mxu0 0
  %172 = vmatpush1.bf16.msra.mxu0 %v132
  %173 = vmatprep.subr.bf16.mxu0 0
  %174 = vmatpush1.bf16.msra.mxu0 %v131
  %175 = vmatprep.subr.bf16.mxu0 0
  %176 = vmatpush1.bf16.msra.mxu0 %v130
  %177 = vmatprep.subr.bf16.mxu0 0
  %178 = vmatpush1.bf16.msra.mxu0 %v129
  %179 = vmatprep.subr.bf16.mxu0 0
  %180 = vmatpush1.bf16.msra.mxu0 %v128
  %181 = vmatprep.subr.bf16.mxu0 0
  %182 = vmatpush1.bf16.msra.mxu0 %v127
  %183 = vmatprep.subr.bf16.mxu0 0
  %184 = vmatpush1.bf16.msra.mxu0 %v126
  %185 = vmatprep.subr.bf16.mxu0 0
  %186 = vmatpush2.bf16.msra.mxu0 0
  %187 = vmatprep.subr.bf16.mxu0 0
  %188 = vmatpush2.bf16.msra.mxu0 0
  %189 = vmatprep.subr.bf16.mxu0 0
  %190 = vmatpush2.bf16.msra.mxu0 0
  %191 = vmatprep.subr.bf16.mxu0 0
  %192 = vmatpush2.bf16.msra.mxu0 0
  %193 = vmatprep.subr.bf16.mxu0 0
  %194 = vmatpush2.bf16.msra.mxu0 0
  %195 = vmatprep.subr.bf16.mxu0 0
  %196 = vmatpush2.bf16.msra.mxu0 0
  %197 = vmatprep.subr.bf16.mxu0 0
  %198 = vmatpush2.bf16.msra.mxu0 0
  %199 = vmatprep.subr.bf16.mxu0 0
  %200 = vmatpush2.bf16.msra.mxu0 0
  %201 = vmatprep.mubr.bf16.mxu0 0
  %202 = vmatmul.mubr.bf16.gmra.mxu0 %v143
  %v203 = vpop.f32.mrf.mxu0
  %v204 = vadd.f32 0.0, %v203
  %v205 = vpop.f32.mrf.mxu0
  %v206 = vpop.f32.mrf.mxu0
  %v207 = vadd.f32 0.0, %v206
  %v208 = vpop.f32.mrf.mxu0
  %209 = vmatprep.mubr.bf16.mxu0 0
  %210 = vmatmul.mubr.bf16.gmra.mxu0 %v146
  %v211 = vpop.f32.mrf.mxu0
  %v212 = vadd.f32 0.0, %v211
  %v213 = vpop.f32.mrf.mxu0
  %v214 = vpop.f32.mrf.mxu0
  %v215 = vadd.f32 0.0, %v214
  %v216 = vpop.f32.mrf.mxu0
  %217 = vmatprep.mubr.bf16.mxu0 0
  %218 = vmatmul.mubr.bf16.gmra.mxu0 %v149
  %v219 = vpop.f32.mrf.mxu0
  %v220 = vadd.f32 0.0, %v219
  %v221 = vpop.f32.mrf.mxu0
  %v222 = vpop.f32.mrf.mxu0
  %v223 = vadd.f32 0.0, %v222
  %v224 = vpop.f32.mrf.mxu0
  %225 = vmatprep.mubr.bf16.mxu0 0
  %226 = vmatmul.mubr.bf16.gmra.mxu0 %v151
  %v227 = vpop.f32.mrf.mxu0
  %v228 = vadd.f32 0.0, %v227
  %v229 = vpop.f32.mrf.mxu0
  %v230 = vpop.f32.mrf.mxu0
  %v231 = vadd.f32 0.0, %v230
  %v232 = vpop.f32.mrf.mxu0
  %233 = vmatprep.mubr.bf16.mxu0 0
  %234 = vmatmul.mubr.bf16.gmra.mxu0 %v154
  %v235 = vpop.f32.mrf.mxu0
  %v236 = vadd.f32 0.0, %v235
  %v237 = vpop.f32.mrf.mxu0
  %v238 = vpop.f32.mrf.mxu0
  %v239 = vadd.f32 0.0, %v238
  %v240 = vpop.f32.mrf.mxu0
  %241 = vmatprep.mubr.bf16.mxu0 0
  %242 = vmatmul.mubr.bf16.gmra.mxu0 %v157
  %v243 = vpop.f32.mrf.mxu0
  %v244 = vadd.f32 0.0, %v243
  %v245 = vpop.f32.mrf.mxu0
  %v246 = vpop.f32.mrf.mxu0
  %v247 = vadd.f32 0.0, %v246
  %v248 = vpop.f32.mrf.mxu0
  %249 = vmatprep.mubr.bf16.mxu0 0
  %250 = vmatmul.mubr.bf16.gmra.mxu0 %v160
  %v251 = vpop.f32.mrf.mxu0
  %v252 = vadd.f32 0.0, %v251
  %v253 = vpop.f32.mrf.mxu0
  %v254 = vpop.f32.mrf.mxu0
  %v255 = vpop.f32.mrf.mxu0
  %256 = vdwg.mxu0
  %vm264 = vcmask 1043456
  %v265 = vrot.slane %v228, 4
  %v266 = vrot.slane %v231, 4
  %v267 = vsel %vm264, %v265, %v266
  %v268 = vrot.slane %v236, 4
  %v269 = vsel %vm264, %v266, %v268
  %v270 = vrot.slane %v239, 4
  %v271 = vsel %vm264, %v268, %v270
  %v272 = vrot.slane %v244, 4
  %v273 = vsel %vm264, %v270, %v272
  %v274 = vrot.slane %v247, 4
  %v275 = vsel %vm264, %v272, %v274
  %v276 = vrot.slane %v252, 4
  %v277 = vsel %vm264, %v274, %v276
  %v285 = vmax.f32 %v204, %v267
  %v286 = vmax.f32 %v207, %v269
  %v287 = vmax.f32 %v212, %v271
  %v288 = vmax.f32 %v215, %v273
  %v289 = vmax.f32 %v220, %v275
  %v290 = vmax.f32 %v223, %v277
  %v291 = vmax.f32 %v228, %v276
  %v292 = vld [vmem:[%s2] sm:$0x1]
  %v294 = vlaneseq
  %v295 = vshrl.u32 %v294, 7
  %v296 = vsub.s32 0, %v295
  %v297 = vrot.slane %v292, %v296
  %v299 = vadd.f32 %v285, %v297
  %v300 = vadd.f32 %v286, %v297
  %v301 = vadd.f32 %v287, %v297
  %v302 = vadd.f32 %v288, %v297
  %v303 = vadd.f32 %v289, %v297
  %v304 = vadd.f32 %v290, %v297
  %v305 = vadd.f32 %v291, %v297
  %vm306 = vcmp.gt.f32.partialorder %v299, 0.0
  %vm307 = vcmp.gt.f32.partialorder %v300, 0.0
  %vm308 = vcmp.gt.f32.partialorder %v301, 0.0
  %vm309 = vcmp.gt.f32.partialorder %v302, 0.0
  %vm310 = vcmp.gt.f32.partialorder %v303, 0.0
  %vm311 = vcmp.gt.f32.partialorder %v304, 0.0
  %vm312 = vcmp.gt.f32.partialorder %v305, 0.0
  %v313 = vmin.f32 %v299, 0.0
  %v314 = vmin.f32 %v300, 0.0
  %v315 = vmin.f32 %v301, 0.0
  %v316 = vmin.f32 %v302, 0.0
  %v317 = vmin.f32 %v303, 0.0
  %v318 = vmin.f32 %v304, 0.0
  %v319 = vmin.f32 %v305, 0.0
  %v320 = vmul.f32 %v313, 1.442695
  %v321 = vpow.pop %v320
  %v322 = vmul.f32 %v314, 1.442695
  %v323 = vpow.pop %v322
  %v324 = vmul.f32 %v315, 1.442695
  %v325 = vpow.pop %v324
  %v326 = vmul.f32 %v316, 1.442695
  %v327 = vpow.pop %v326
  %v328 = vmul.f32 %v317, 1.442695
  %v329 = vpow.pop %v328
  %v330 = vmul.f32 %v318, 1.442695
  %v331 = vpow.pop %v330
  %v332 = vmul.f32 %v319, 1.442695
  %v333 = vpow.pop %v332
  %v334 = vsub.f32 %v321, 1.0
  %v335 = vsub.f32 %v323, 1.0
  %v336 = vsub.f32 %v325, 1.0
  %v337 = vsub.f32 %v327, 1.0
  %v338 = vsub.f32 %v329, 1.0
  %v339 = vsub.f32 %v331, 1.0
  %v340 = vsub.f32 %v333, 1.0
  %v341 = vsel %vm306, %v299, %v334
  %v342 = vsel %vm307, %v300, %v335
  %v343 = vsel %vm308, %v301, %v336
  %v344 = vsel %vm309, %v302, %v337
  %v345 = vsel %vm310, %v303, %v338
  %v346 = vsel %vm311, %v304, %v339
  %v347 = vsel %vm312, %v305, %v340
  %v348 = vpack.c.bf16 %v342, %v341
  %v349 = vpack.c.bf16 %v344, %v343
  %v350 = vpack.c.bf16 %v346, %v345
  %v351 = vpack.c.bf16 %v347, %v347
  %v356 = vunpack.c.l.b16 %v348
  %v357 = vunpack.c.h.b16 %v348
  %v358 = vunpack.c.l.b16 %v349
  %v359 = vunpack.c.h.b16 %v349
  %v360 = vunpack.c.l.b16 %v350
  %v361 = vunpack.c.h.b16 %v350
  %v362 = vunpack.c.l.b16 %v351
  %v363 = vpack.c.b16 %v356, %v356
  %v364 = vpack.c.b16 %v357, %v357
  %v365 = vpack.c.b16 %v358, %v358
  %v366 = vpack.c.b16 %v359, %v359
  %v367 = vpack.c.b16 %v360, %v360
  %v368 = vpack.c.b16 %v361, %v361
  %v369 = vpack.c.b16 %v362, %v362
  %vm377 = vcmask 404480
  %378 = vst.msk [vmem:[%s3] sm:$0xf] %vm377, %v363
  %379 = vst.msk [vmem:[%s3 + $0x4] sm:$0xf] %vm377, %v364
  %380 = vst.msk [vmem:[%s3 + $0x8] sm:$0xf] %vm377, %v365
  %381 = vst.msk [vmem:[%s3 + $0xc] sm:$0xf] %vm377, %v366
  %382 = vst.msk [vmem:[%s3 + $0x10] sm:$0xf] %vm377, %v367
  %383 = vst.msk [vmem:[%s3 + $0x14] sm:$0xf] %vm377, %v368
  %vm384 = vcmask 402432
  %385 = vst.msk [vmem:[%s3 + $0x18] sm:$0x3] %vm384, %v369
  // Predicated region
  $region14: #{deep_conv_net_forward.5} parent=0 // pred_check
    _
  $region15: #{deep_conv_net_forward.5} parent=0 // pred_check_branch
    %387 = sbr.rel (0) target = $region17
  $region16: #{deep_conv_net_forward.5} parent=0 // pred_region
    _
  $region17: #{deep_conv_net_forward.5} parent=0 // pred_fallthru
    _
  // Predicated region
  $region18: #{deep_conv_net_forward.5} parent=0 // pred_check
    _
  $region19: #{deep_conv_net_forward.5} parent=0 // pred_check_branch
    %389 = sbr.rel (0) target = $region21
  $region20: #{deep_conv_net_forward.5} parent=0 // pred_region
    _
  $region21: #{deep_conv_net_forward.5} parent=0 // pred_fallthru
    _

// kernel: deep_conv_net_forward.6
$region0: #{deep_conv_net_forward.6}
  #allocation0 [shape = 'u32[]', space=smem, size = 0x4, offset = 0x4, fixed_abs, tag = 'smem constant byte address 0x4 - core index']
  #allocation1 [shape = 'u32[144,128]{1,0:T(1,128)}', space=vmem, size = 0x12000, scoped, tag = 'internal scratch']
  %s0 = inlined_call_operand.vmem [shape: bf16[2,10,250], index: 0, kind: input, shape index: {}]
  %s1 = inlined_call_operand.vmem [shape: bf16[250,100], index: 1, kind: input, shape index: {}]
  %s2 = inlined_call_operand.vmem [shape: f32[1,100], index: 2, kind: input, shape index: {}]
  %s3 = inlined_call_operand.vmem [shape: bf16[10,100], index: 3, kind: output, shape index: {}]
  %s4 = sld [smem:[#allocation0]]
  $region22: #{deep_conv_net_forward.6} parent=0
    _
  %s6 = ssub.s32 1, %s4
  %s7 = scalar_select 0, %s6, %s4
  // Predicated region
  $region2: #{deep_conv_net_forward.6} parent=0 // pred_check
    _
  $region3: #{deep_conv_net_forward.6} parent=0 // pred_check_branch
    %9 = sbr.rel (0) target = $region5
  $region4: #{deep_conv_net_forward.6} parent=0 // pred_region
    _
  $region5: #{deep_conv_net_forward.6} parent=0 // pred_fallthru
    _
  // Predicated region
  $region6: #{deep_conv_net_forward.6} parent=0 // pred_check
    _
  $region7: #{deep_conv_net_forward.6} parent=0 // pred_check_branch
    %11 = sbr.rel (0) target = $region9
  $region8: #{deep_conv_net_forward.6} parent=0 // pred_region
    _
  $region9: #{deep_conv_net_forward.6} parent=0 // pred_fallthru
    _
  // Predicated region
  $region10: #{deep_conv_net_forward.6} parent=0 // pred_check
    _
  $region11: #{deep_conv_net_forward.6} parent=0 // pred_check_branch
    %13 = sbr.rel (0) target = $region13
  $region12: #{deep_conv_net_forward.6} parent=0 // pred_region
    _
  $region13: #{deep_conv_net_forward.6} parent=0 // pred_fallthru
    _
  %v15 = vld [vmem:[%s0] sm:$0xff]
  %v16 = vld [vmem:[%s0 + $0x8] sm:$0x11]
  %s17 = scalar_lea.vmem %s0, 16
  %v18 = vld [vmem:[%s17] sm:$0xff]
  %v19 = vld [vmem:[%s17 + $0x8] sm:$0x11]
  %v22 = vunpack.c.l.b16 %v15
  %v23 = vunpack.c.h.b16 %v15
  %v24 = vunpack.c.l.b16 %v16
  %v25 = vunpack.c.h.b16 %v16
  %v26 = vpack.c.b16 %v24, %v22
  %v27 = vpack.c.b16 %v25, %v23
  %v30 = vunpack.c.l.b16 %v18
  %v31 = vunpack.c.h.b16 %v18
  %v32 = vunpack.c.l.b16 %v19
  %v33 = vunpack.c.h.b16 %v19
  %v34 = vpack.c.b16 %v32, %v30
  %v35 = vpack.c.b16 %v33, %v31
  %v36 = vrot.slane %v34, 3
  %v37 = vrot.slane %v35, 3
  %vm39 = vcmask 1044480
  %v42 = vsel %vm39, %v26, %v36
  %v46 = vsel %vm39, %v27, %v37
  %v47 = vld [vmem:[%s1] sm:$0xf]
  %v48 = vld [vmem:[%s1 + $0x4] sm:$0xf]
  %v49 = vld [vmem:[%s1 + $0x8] sm:$0xf]
  %v50 = vld [vmem:[%s1 + $0xc] sm:$0xf]
  %v51 = vld [vmem:[%s1 + $0x10] sm:$0xf]
  %v52 = vld [vmem:[%s1 + $0x14] sm:$0xf]
  %v53 = vld [vmem:[%s1 + $0x18] sm:$0xf]
  %v54 = vld [vmem:[%s1 + $0x1c] sm:$0xf]
  %v55 = vld [vmem:[%s1 + $0x20] sm:$0xf]
  %v56 = vld [vmem:[%s1 + $0x24] sm:$0xf]
  %v57 = vld [vmem:[%s1 + $0x28] sm:$0xf]
  %v58 = vld [vmem:[%s1 + $0x2c] sm:$0xf]
  %v59 = vld [vmem:[%s1 + $0x30] sm:$0xf]
  %v60 = vld [vmem:[%s1 + $0x34] sm:$0xf]
  %v61 = vld [vmem:[%s1 + $0x38] sm:$0xf]
  %v62 = vld [vmem:[%s1 + $0x3c] sm:$0xf]
  %v63 = vld [vmem:[%s1 + $0x40] sm:$0xf]
  %v64 = vld [vmem:[%s1 + $0x44] sm:$0xf]
  %v65 = vld [vmem:[%s1 + $0x48] sm:$0xf]
  %v66 = vld [vmem:[%s1 + $0x4c] sm:$0xf]
  %v67 = vld [vmem:[%s1 + $0x50] sm:$0xf]
  %v68 = vld [vmem:[%s1 + $0x54] sm:$0xf]
  %v69 = vld [vmem:[%s1 + $0x58] sm:$0xf]
  %v70 = vld [vmem:[%s1 + $0x5c] sm:$0xf]
  %v71 = vld [vmem:[%s1 + $0x60] sm:$0xf]
  %v72 = vld [vmem:[%s1 + $0x64] sm:$0xf]
  %v73 = vld [vmem:[%s1 + $0x68] sm:$0xf]
  %v74 = vld [vmem:[%s1 + $0x6c] sm:$0xf]
  %v75 = vld [vmem:[%s1 + $0x70] sm:$0xf]
  %v76 = vld [vmem:[%s1 + $0x74] sm:$0xf]
  %v77 = vld [vmem:[%s1 + $0x78] sm:$0xf]
  %v78 = vld [vmem:[%s1 + $0x7c] sm:$0x1]
  %v111 = vunpack.c.l.b16 %v47
  %v112 = vunpack.c.l.b16 %v48
  %v113 = vunpack.c.l.b16 %v49
  %v114 = vunpack.c.l.b16 %v50
  %v115 = vunpack.c.l.b16 %v51
  %v116 = vunpack.c.l.b16 %v52
  %v117 = vunpack.c.l.b16 %v53
  %v118 = vunpack.c.l.b16 %v54
  %v119 = vunpack.c.l.b16 %v55
  %v120 = vunpack.c.l.b16 %v56
  %v121 = vunpack.c.l.b16 %v57
  %v122 = vunpack.c.l.b16 %v58
  %v123 = vunpack.c.l.b16 %v59
  %v124 = vunpack.c.l.b16 %v60
  %v125 = vunpack.c.l.b16 %v61
  %v126 = vunpack.c.l.b16 %v62
  %v127 = vunpack.c.l.b16 %v63
  %v128 = vunpack.c.l.b16 %v64
  %v129 = vunpack.c.l.b16 %v65
  %v130 = vunpack.c.l.b16 %v66
  %v131 = vunpack.c.l.b16 %v67
  %v132 = vunpack.c.l.b16 %v68
  %v133 = vunpack.c.l.b16 %v69
  %v134 = vunpack.c.l.b16 %v70
  %v135 = vunpack.c.l.b16 %v71
  %v136 = vunpack.c.l.b16 %v72
  %v137 = vunpack.c.l.b16 %v73
  %v138 = vunpack.c.l.b16 %v74
  %v139 = vunpack.c.l.b16 %v75
  %v140 = vunpack.c.l.b16 %v76
  %v141 = vunpack.c.l.b16 %v77
  %v142 = vunpack.c.l.b16 %v78
  %v143 = vpack.c.b16 %v112, %v111
  %v144 = vpack.c.b16 %v114, %v113
  %v145 = vpack.c.b16 %v116, %v115
  %v146 = vpack.c.b16 %v118, %v117
  %v147 = vpack.c.b16 %v120, %v119
  %v148 = vpack.c.b16 %v122, %v121
  %v149 = vpack.c.b16 %v124, %v123
  %v150 = vpack.c.b16 %v126, %v125
  %v151 = vpack.c.b16 %v128, %v127
  %v152 = vpack.c.b16 %v130, %v129
  %v153 = vpack.c.b16 %v132, %v131
  %v154 = vpack.c.b16 %v134, %v133
  %v155 = vpack.c.b16 %v136, %v135
  %v156 = vpack.c.b16 %v138, %v137
  %v157 = vpack.c.b16 %v140, %v139
  %v158 = vpack.c.b16 %v142, %v141
  %vm174 = vcmask 998400
  %v175 = vsel %vm174, %v46, 0
  %v177 = vsel %vm174, %v37, 0
  %v180 = vsel %vm39, %v158, 0
  %182 = vmatprep.subr.bf16.mxu0 0
  %183 = vmatpush1.bf16.msra.mxu0 %v150
  %184 = vmatprep.subr.bf16.mxu0 0
  %185 = vmatpush1.bf16.msra.mxu0 %v149
  %186 = vmatprep.subr.bf16.mxu0 0
  %187 = vmatpush1.bf16.msra.mxu0 %v148
  %188 = vmatprep.subr.bf16.mxu0 0
  %189 = vmatpush1.bf16.msra.mxu0 %v147
  %190 = vmatprep.subr.bf16.mxu0 0
  %191 = vmatpush1.bf16.msra.mxu0 %v146
  %192 = vmatprep.subr.bf16.mxu0 0
  %193 = vmatpush1.bf16.msra.mxu0 %v145
  %194 = vmatprep.subr.bf16.mxu0 0
  %195 = vmatpush1.bf16.msra.mxu0 %v144
  %196 = vmatprep.subr.bf16.mxu0 0
  %197 = vmatpush1.bf16.msra.mxu0 %v143
  %198 = vmatprep.subr.bf16.mxu0 0
  %199 = vmatpush2.bf16.msra.mxu0 %v180
  %200 = vmatprep.subr.bf16.mxu0 0
  %201 = vmatpush2.bf16.msra.mxu0 %v157
  %202 = vmatprep.subr.bf16.mxu0 0
  %203 = vmatpush2.bf16.msra.mxu0 %v156
  %204 = vmatprep.subr.bf16.mxu0 0
  %205 = vmatpush2.bf16.msra.mxu0 %v155
  %206 = vmatprep.subr.bf16.mxu0 0
  %207 = vmatpush2.bf16.msra.mxu0 %v154
  %208 = vmatprep.subr.bf16.mxu0 0
  %209 = vmatpush2.bf16.msra.mxu0 %v153
  %210 = vmatprep.subr.bf16.mxu0 0
  %211 = vmatpush2.bf16.msra.mxu0 %v152
  %212 = vmatprep.subr.bf16.mxu0 0
  %213 = vmatpush2.bf16.msra.mxu0 %v151
  %214 = vmatprep.mubr.bf16.mxu0 %v175
  %215 = vmatmul.mubr.bf16.gmra.mxu0 %v42
  %v216 = vpop.f32.mrf.mxu0
  %v217 = vadd.f32 0.0, %v216
  %v218 = vpop.f32.mrf.mxu0
  %v219 = vpop.f32.mrf.mxu0
  %v220 = vadd.f32 0.0, %v219
  %v221 = vpop.f32.mrf.mxu0
  %222 = vmatprep.mubr.bf16.mxu0 %v177
  %223 = vmatmul.mubr.bf16.gmra.mxu0 %v36
  %v224 = vpop.f32.mrf.mxu0
  %v225 = vadd.f32 0.0, %v224
  %v226 = vpop.f32.mrf.mxu0
  %v227 = vpop.f32.mrf.mxu0
  %v228 = vpop.f32.mrf.mxu0
  %229 = vdwg.mxu0
  %vm232 = vcmask 1045504
  %v233 = vrot.slane %v220, 2
  %v234 = vrot.slane %v225, 2
  %v235 = vsel %vm232, %v233, %v234
  %v238 = vmax.f32 %v217, %v235
  %v239 = vmax.f32 %v220, %v234
  %v240 = vld [vmem:[%s2] sm:$0x1]
  %v242 = vlaneseq
  %v243 = vshrl.u32 %v242, 7
  %v244 = vsub.s32 0, %v243
  %v245 = vrot.slane %v240, %v244
  %v247 = vadd.f32 %v238, %v245
  %v248 = vadd.f32 %v239, %v245
  %vm249 = vcmp.gt.f32.partialorder %v247, 0.0
  %vm250 = vcmp.gt.f32.partialorder %v248, 0.0
  %v251 = vmin.f32 %v247, 0.0
  %v252 = vmin.f32 %v248, 0.0
  %v253 = vmul.f32 %v251, 1.442695
  %v254 = vpow.pop %v253
  %v255 = vmul.f32 %v252, 1.442695
  %v256 = vpow.pop %v255
  %v257 = vsub.f32 %v254, 1.0
  %v258 = vsub.f32 %v256, 1.0
  %v259 = vsel %vm249, %v247, %v257
  %v260 = vsel %vm250, %v248, %v258
  %v261 = vpack.c.bf16 %v260, %v259
  %v263 = vunpack.c.l.b16 %v261
  %v264 = vunpack.c.h.b16 %v261
  %v265 = vpack.c.b16 %v263, %v263
  %v266 = vpack.c.b16 %v264, %v264
  %vm269 = vcmask 814080
  %270 = vst.msk [vmem:[%s3] sm:$0xf] %vm269, %v265
  %vm271 = vcmask 811008
  %272 = vst.msk [vmem:[%s3 + $0x4] sm:$0x1] %vm271, %v266
  // Predicated region
  $region14: #{deep_conv_net_forward.6} parent=0 // pred_check
    _
  $region15: #{deep_conv_net_forward.6} parent=0 // pred_check_branch
    %274 = sbr.rel (0) target = $region17
  $region16: #{deep_conv_net_forward.6} parent=0 // pred_region
    _
  $region17: #{deep_conv_net_forward.6} parent=0 // pred_fallthru
    _
  // Predicated region
  $region18: #{deep_conv_net_forward.6} parent=0 // pred_check
    _
  $region19: #{deep_conv_net_forward.6} parent=0 // pred_check_branch
    %276 = sbr.rel (0) target = $region21
  $region20: #{deep_conv_net_forward.6} parent=0 // pred_region
    _
  $region21: #{deep_conv_net_forward.6} parent=0 // pred_fallthru
    _

// kernel: deep_conv_net_forward.7
$region0: #{deep_conv_net_forward.7}
  #allocation0 [shape = 'u32[]', space=smem, size = 0x4, offset = 0x4, fixed_abs, tag = 'smem constant byte address 0x4 - core index']
  #allocation1 [shape = 'u32[144,128]{1,0:T(1,128)}', space=vmem, size = 0x12000, scoped, tag = 'internal scratch']
  %s0 = inlined_call_operand.vmem [shape: bf16[2,4,500], index: 0, kind: input, shape index: {}]
  %s1 = inlined_call_operand.vmem [shape: bf16[500,200], index: 1, kind: input, shape index: {}]
  %s2 = inlined_call_operand.vmem [shape: f32[1,200], index: 2, kind: input, shape index: {}]
  %s3 = inlined_call_operand.vmem [shape: bf16[4,200], index: 3, kind: output, shape index: {}]
  %s4 = sld [smem:[#allocation0]]
  $region22: #{deep_conv_net_forward.7} parent=0
    _
  %s6 = ssub.s32 1, %s4
  %s7 = scalar_select 0, %s6, %s4
  // Predicated region
  $region2: #{deep_conv_net_forward.7} parent=0 // pred_check
    _
  $region3: #{deep_conv_net_forward.7} parent=0 // pred_check_branch
    %9 = sbr.rel (0) target = $region5
  $region4: #{deep_conv_net_forward.7} parent=0 // pred_region
    _
  $region5: #{deep_conv_net_forward.7} parent=0 // pred_fallthru
    _
  // Predicated region
  $region6: #{deep_conv_net_forward.7} parent=0 // pred_check
    _
  $region7: #{deep_conv_net_forward.7} parent=0 // pred_check_branch
    %11 = sbr.rel (0) target = $region9
  $region8: #{deep_conv_net_forward.7} parent=0 // pred_region
    _
  $region9: #{deep_conv_net_forward.7} parent=0 // pred_fallthru
    _
  // Predicated region
  $region10: #{deep_conv_net_forward.7} parent=0 // pred_check
    _
  $region11: #{deep_conv_net_forward.7} parent=0 // pred_check_branch
    %13 = sbr.rel (0) target = $region13
  $region12: #{deep_conv_net_forward.7} parent=0 // pred_region
    _
  $region13: #{deep_conv_net_forward.7} parent=0 // pred_fallthru
    _
  %v14 = vld [vmem:[%s0] sm:$0xff]
  %s15 = scalar_lea.vmem %s0, 8
  %v16 = vld [vmem:[%s15] sm:$0xff]
  %v18 = vcombine.high %v14, %v14
  %v20 = vunpack.c.l.s4 1983009808
  %v21 = vunpack.c.0.s8 %v20
  %v22 = vlaneseq
  %v23 = vshrl.u32 %v22, 7
  %v24 = vsub.s32 %v21, %v23
  %v25 = vrot.slane %v14, %v24
  %v27 = vunpack.c.l.s4 1983009808
  %v28 = vunpack.c.0.s8 %v27
  %v29 = vlaneseq
  %v30 = vshrl.u32 %v29, 7
  %v31 = vsub.s32 %v28, %v30
  %v32 = vrot.slane %v18, %v31
  %v33 = vcombine.high %v25, %v25
  %v34 = vcombine.high %v32, %v32
  %v36 = vcombine.low %v16, %v16
  %v38 = vunpack.c.l.s4 1983009808
  %v39 = vunpack.c.0.s8 %v38
  %v40 = vlaneseq
  %v41 = vshrl.u32 %v40, 7
  %v42 = vsub.s32 %v39, %v41
  %v43 = vrot.slane %v36, %v42
  %v45 = vunpack.c.l.s4 1983009808
  %v46 = vunpack.c.0.s8 %v45
  %v47 = vlaneseq
  %v48 = vshrl.u32 %v47, 7
  %v49 = vsub.s32 %v46, %v48
  %v50 = vrot.slane %v16, %v49
  %v51 = vcombine.high %v43, %v43
  %v52 = vcombine.high %v50, %v50
  %vm53 = vcmask 1041408
  %v56 = vsel %vm53, %v25, %v43
  %v60 = vsel %vm53, %v33, %v51
  %v64 = vsel %vm53, %v32, %v50
  %v68 = vsel %vm53, %v34, %v52
  %v69 = vld [vmem:[%s1] sm:$0xff]
  %v70 = vld [vmem:[%s1 + $0x8] sm:$0xff]
  %v71 = vld [vmem:[%s1 + $0x10] sm:$0xff]
  %v72 = vld [vmem:[%s1 + $0x18] sm:$0xff]
  %v73 = vld [vmem:[%s1 + $0x20] sm:$0xff]
  %v74 = vld [vmem:[%s1 + $0x28] sm:$0xff]
  %v75 = vld [vmem:[%s1 + $0x30] sm:$0xff]
  %v76 = vld [vmem:[%s1 + $0x38] sm:$0xff]
  %v77 = vld [vmem:[%s1 + $0x40] sm:$0xff]
  %v78 = vld [vmem:[%s1 + $0x48] sm:$0xff]
  %v79 = vld [vmem:[%s1 + $0x50] sm:$0xff]
  %v80 = vld [vmem:[%s1 + $0x58] sm:$0xff]
  %v81 = vld [vmem:[%s1 + $0x60] sm:$0xff]
  %v82 = vld [vmem:[%s1 + $0x68] sm:$0xff]
  %v83 = vld [vmem:[%s1 + $0x70] sm:$0xff]
  %v84 = vld [vmem:[%s1 + $0x78] sm:$0xff]
  %v85 = vld [vmem:[%s1 + $0x80] sm:$0xff]
  %v86 = vld [vmem:[%s1 + $0x88] sm:$0xff]
  %v87 = vld [vmem:[%s1 + $0x90] sm:$0xff]
  %v88 = vld [vmem:[%s1 + $0x98] sm:$0xff]
  %v89 = vld [vmem:[%s1 + $0xa0] sm:$0xff]
  %v90 = vld [vmem:[%s1 + $0xa8] sm:$0xff]
  %v91 = vld [vmem:[%s1 + $0xb0] sm:$0xff]
  %v92 = vld [vmem:[%s1 + $0xb8] sm:$0xff]
  %v93 = vld [vmem:[%s1 + $0xc0] sm:$0xff]
  %v94 = vld [vmem:[%s1 + $0xc8] sm:$0xff]
  %v95 = vld [vmem:[%s1 + $0xd0] sm:$0xff]
  %v96 = vld [vmem:[%s1 + $0xd8] sm:$0xff]
  %v97 = vld [vmem:[%s1 + $0xe0] sm:$0xff]
  %v98 = vld [vmem:[%s1 + $0xe8] sm:$0xff]
  %v99 = vld [vmem:[%s1 + $0xf0] sm:$0xff]
  %v100 = vld [vmem:[%s1 + $0xf8] sm:$0xff]
  %v101 = vld [vmem:[%s1 + $0x100] sm:$0xff]
  %v102 = vld [vmem:[%s1 + $0x108] sm:$0xff]
  %v103 = vld [vmem:[%s1 + $0x110] sm:$0xff]
  %v104 = vld [vmem:[%s1 + $0x118] sm:$0xff]
  %v105 = vld [vmem:[%s1 + $0x120] sm:$0xff]
  %v106 = vld [vmem:[%s1 + $0x128] sm:$0xff]
  %v107 = vld [vmem:[%s1 + $0x130] sm:$0xff]
  %v108 = vld [vmem:[%s1 + $0x138] sm:$0xff]
  %v109 = vld [vmem:[%s1 + $0x140] sm:$0xff]
  %v110 = vld [vmem:[%s1 + $0x148] sm:$0xff]
  %v111 = vld [vmem:[%s1 + $0x150] sm:$0xff]
  %v112 = vld [vmem:[%s1 + $0x158] sm:$0xff]
  %v113 = vld [vmem:[%s1 + $0x160] sm:$0xff]
  %v114 = vld [vmem:[%s1 + $0x168] sm:$0xff]
  %v115 = vld [vmem:[%s1 + $0x170] sm:$0xff]
  %v116 = vld [vmem:[%s1 + $0x178] sm:$0xff]
  %v117 = vld [vmem:[%s1 + $0x180] sm:$0xff]
  %v118 = vld [vmem:[%s1 + $0x188] sm:$0xff]
  %v119 = vld [vmem:[%s1 + $0x190] sm:$0xff]
  %v120 = vld [vmem:[%s1 + $0x198] sm:$0xff]
  %v121 = vld [vmem:[%s1 + $0x1a0] sm:$0xff]
  %v122 = vld [vmem:[%s1 + $0x1a8] sm:$0xff]
  %v123 = vld [vmem:[%s1 + $0x1b0] sm:$0xff]
  %v124 = vld [vmem:[%s1 + $0x1b8] sm:$0xff]
  %v125 = vld [vmem:[%s1 + $0x1c0] sm:$0xff]
  %v126 = vld [vmem:[%s1 + $0x1c8] sm:$0xff]
  %v127 = vld [vmem:[%s1 + $0x1d0] sm:$0xff]
  %v128 = vld [vmem:[%s1 + $0x1d8] sm:$0xff]
  %v129 = vld [vmem:[%s1 + $0x1e0] sm:$0xff]
  %v130 = vld [vmem:[%s1 + $0x1e8] sm:$0xff]
  %v131 = vld [vmem:[%s1 + $0x1f0] sm:$0x33]
  %v195 = vunpack.c.l.b16 %v69
  %v196 = vunpack.c.h.b16 %v69
  %v197 = vunpack.c.l.b16 %v70
  %v198 = vunpack.c.h.b16 %v70
  %v199 = vunpack.c.l.b16 %v71
  %v200 = vunpack.c.h.b16 %v71
  %v201 = vunpack.c.l.b16 %v72
  %v202 = vunpack.c.h.b16 %v72
  %v203 = vunpack.c.l.b16 %v73
  %v204 = vunpack.c.h.b16 %v73
  %v205 = vunpack.c.l.b16 %v74
  %v206 = vunpack.c.h.b16 %v74
  %v207 = vunpack.c.l.b16 %v75
  %v208 = vunpack.c.h.b16 %v75
  %v209 = vunpack.c.l.b16 %v76
  %v210 = vunpack.c.h.b16 %v76
  %v211 = vunpack.c.l.b16 %v77
  %v212 = vunpack.c.h.b16 %v77
  %v213 = vunpack.c.l.b16 %v78
  %v214 = vunpack.c.h.b16 %v78
  %v215 = vunpack.c.l.b16 %v79
  %v216 = vunpack.c.h.b16 %v79
  %v217 = vunpack.c.l.b16 %v80
  %v218 = vunpack.c.h.b16 %v80
  %v219 = vunpack.c.l.b16 %v81
  %v220 = vunpack.c.h.b16 %v81
  %v221 = vunpack.c.l.b16 %v82
  %v222 = vunpack.c.h.b16 %v82
  %v223 = vunpack.c.l.b16 %v83
  %v224 = vunpack.c.h.b16 %v83
  %v225 = vunpack.c.l.b16 %v84
  %v226 = vunpack.c.h.b16 %v84
  %v227 = vunpack.c.l.b16 %v85
  %v228 = vunpack.c.h.b16 %v85
  %v229 = vunpack.c.l.b16 %v86
  %v230 = vunpack.c.h.b16 %v86
  %v231 = vunpack.c.l.b16 %v87
  %v232 = vunpack.c.h.b16 %v87
  %v233 = vunpack.c.l.b16 %v88
  %v234 = vunpack.c.h.b16 %v88
  %v235 = vunpack.c.l.b16 %v89
  %v236 = vunpack.c.h.b16 %v89
  %v237 = vunpack.c.l.b16 %v90
  %v238 = vunpack.c.h.b16 %v90
  %v239 = vunpack.c.l.b16 %v91
  %v240 = vunpack.c.h.b16 %v91
  %v241 = vunpack.c.l.b16 %v92
  %v242 = vunpack.c.h.b16 %v92
  %v243 = vunpack.c.l.b16 %v93
  %v244 = vunpack.c.h.b16 %v93
  %v245 = vunpack.c.l.b16 %v94
  %v246 = vunpack.c.h.b16 %v94
  %v247 = vunpack.c.l.b16 %v95
  %v248 = vunpack.c.h.b16 %v95
  %v249 = vunpack.c.l.b16 %v96
  %v250 = vunpack.c.h.b16 %v96
  %v251 = vunpack.c.l.b16 %v97
  %v252 = vunpack.c.h.b16 %v97
  %v253 = vunpack.c.l.b16 %v98
  %v254 = vunpack.c.h.b16 %v98
  %v255 = vunpack.c.l.b16 %v99
  %v256 = vunpack.c.h.b16 %v99
  %v257 = vunpack.c.l.b16 %v100
  %v258 = vunpack.c.h.b16 %v100
  %v259 = vunpack.c.l.b16 %v101
  %v260 = vunpack.c.h.b16 %v101
  %v261 = vunpack.c.l.b16 %v102
  %v262 = vunpack.c.h.b16 %v102
  %v263 = vunpack.c.l.b16 %v103
  %v264 = vunpack.c.h.b16 %v103
  %v265 = vunpack.c.l.b16 %v104
  %v266 = vunpack.c.h.b16 %v104
  %v267 = vunpack.c.l.b16 %v105
  %v268 = vunpack.c.h.b16 %v105
  %v269 = vunpack.c.l.b16 %v106
  %v270 = vunpack.c.h.b16 %v106
  %v271 = vunpack.c.l.b16 %v107
  %v272 = vunpack.c.h.b16 %v107
  %v273 = vunpack.c.l.b16 %v108
  %v274 = vunpack.c.h.b16 %v108
  %v275 = vunpack.c.l.b16 %v109
  %v276 = vunpack.c.h.b16 %v109
  %v277 = vunpack.c.l.b16 %v110
  %v278 = vunpack.c.h.b16 %v110
  %v279 = vunpack.c.l.b16 %v111
  %v280 = vunpack.c.h.b16 %v111
  %v281 = vunpack.c.l.b16 %v112
  %v282 = vunpack.c.h.b16 %v112
  %v283 = vunpack.c.l.b16 %v113
  %v284 = vunpack.c.h.b16 %v113
  %v285 = vunpack.c.l.b16 %v114
  %v286 = vunpack.c.h.b16 %v114
  %v287 = vunpack.c.l.b16 %v115
  %v288 = vunpack.c.h.b16 %v115
  %v289 = vunpack.c.l.b16 %v116
  %v290 = vunpack.c.h.b16 %v116
  %v291 = vunpack.c.l.b16 %v117
  %v292 = vunpack.c.h.b16 %v117
  %v293 = vunpack.c.l.b16 %v118
  %v294 = vunpack.c.h.b16 %v118
  %v295 = vunpack.c.l.b16 %v119
  %v296 = vunpack.c.h.b16 %v119
  %v297 = vunpack.c.l.b16 %v120
  %v298 = vunpack.c.h.b16 %v120
  %v299 = vunpack.c.l.b16 %v121
  %v300 = vunpack.c.h.b16 %v121
  %v301 = vunpack.c.l.b16 %v122
  %v302 = vunpack.c.h.b16 %v122
  %v303 = vunpack.c.l.b16 %v123
  %v304 = vunpack.c.h.b16 %v123
  %v305 = vunpack.c.l.b16 %v124
  %v306 = vunpack.c.h.b16 %v124
  %v307 = vunpack.c.l.b16 %v125
  %v308 = vunpack.c.h.b16 %v125
  %v309 = vunpack.c.l.b16 %v126
  %v310 = vunpack.c.h.b16 %v126
  %v311 = vunpack.c.l.b16 %v127
  %v312 = vunpack.c.h.b16 %v127
  %v313 = vunpack.c.l.b16 %v128
  %v314 = vunpack.c.h.b16 %v128
  %v315 = vunpack.c.l.b16 %v129
  %v316 = vunpack.c.h.b16 %v129
  %v317 = vunpack.c.l.b16 %v130
  %v318 = vunpack.c.h.b16 %v130
  %v319 = vunpack.c.l.b16 %v131
  %v320 = vunpack.c.h.b16 %v131
  %v321 = vpack.c.b16 %v197, %v195
  %v322 = vpack.c.b16 %v198, %v196
  %v323 = vpack.c.b16 %v201, %v199
  %v324 = vpack.c.b16 %v202, %v200
  %v325 = vpack.c.b16 %v205, %v203
  %v326 = vpack.c.b16 %v206, %v204
  %v327 = vpack.c.b16 %v209, %v207
  %v328 = vpack.c.b16 %v210, %v208
  %v329 = vpack.c.b16 %v213, %v211
  %v330 = vpack.c.b16 %v214, %v212
  %v331 = vpack.c.b16 %v217, %v215
  %v332 = vpack.c.b16 %v218, %v216
  %v333 = vpack.c.b16 %v221, %v219
  %v334 = vpack.c.b16 %v222, %v220
  %v335 = vpack.c.b16 %v225, %v223
  %v336 = vpack.c.b16 %v226, %v224
  %v337 = vpack.c.b16 %v229, %v227
  %v338 = vpack.c.b16 %v230, %v228
  %v339 = vpack.c.b16 %v233, %v231
  %v340 = vpack.c.b16 %v234, %v232
  %v341 = vpack.c.b16 %v237, %v235
  %v342 = vpack.c.b16 %v238, %v236
  %v343 = vpack.c.b16 %v241, %v239
  %v344 = vpack.c.b16 %v242, %v240
  %v345 = vpack.c.b16 %v245, %v243
  %v346 = vpack.c.b16 %v246, %v244
  %v347 = vpack.c.b16 %v249, %v247
  %v348 = vpack.c.b16 %v250, %v248
  %v349 = vpack.c.b16 %v253, %v251
  %v350 = vpack.c.b16 %v254, %v252
  %v351 = vpack.c.b16 %v257, %v255
  %v352 = vpack.c.b16 %v258, %v256
  %v353 = vpack.c.b16 %v261, %v259
  %v354 = vpack.c.b16 %v262, %v260
  %v355 = vpack.c.b16 %v265, %v263
  %v356 = vpack.c.b16 %v266, %v264
  %v357 = vpack.c.b16 %v269, %v267
  %v358 = vpack.c.b16 %v270, %v268
  %v359 = vpack.c.b16 %v273, %v271
  %v360 = vpack.c.b16 %v274, %v272
  %v361 = vpack.c.b16 %v277, %v275
  %v362 = vpack.c.b16 %v278, %v276
  %v363 = vpack.c.b16 %v281, %v279
  %v364 = vpack.c.b16 %v282, %v280
  %v365 = vpack.c.b16 %v285, %v283
  %v366 = vpack.c.b16 %v286, %v284
  %v367 = vpack.c.b16 %v289, %v287
  %v368 = vpack.c.b16 %v290, %v288
  %v369 = vpack.c.b16 %v293, %v291
  %v370 = vpack.c.b16 %v294, %v292
  %v371 = vpack.c.b16 %v297, %v295
  %v372 = vpack.c.b16 %v298, %v296
  %v373 = vpack.c.b16 %v301, %v299
  %v374 = vpack.c.b16 %v302, %v300
  %v375 = vpack.c.b16 %v305, %v303
  %v376 = vpack.c.b16 %v306, %v304
  %v377 = vpack.c.b16 %v309, %v307
  %v378 = vpack.c.b16 %v310, %v308
  %v379 = vpack.c.b16 %v313, %v311
  %v380 = vpack.c.b16 %v314, %v312
  %v381 = vpack.c.b16 %v317, %v315
  %v382 = vpack.c.b16 %v318, %v316
  %v383 = vpack.c.b16 %v319, %v319
  %v384 = vpack.c.b16 %v320, %v320
  %vm447 = vcmask 949248
  %v448 = vsel %vm447, %v68, 0
  %v451 = vsel %vm53, %v383, 0
  %v454 = vsel %vm53, %v384, 0
  %456 = vmatprep.subr.bf16.mxu0 %v336
  %457 = vmatpush1.bf16.msra.mxu0 %v335
  %458 = vmatprep.subr.bf16.mxu0 %v334
  %459 = vmatpush1.bf16.msra.mxu0 %v333
  %460 = vmatprep.subr.bf16.mxu0 %v332
  %461 = vmatpush1.bf16.msra.mxu0 %v331
  %462 = vmatprep.subr.bf16.mxu0 %v330
  %463 = vmatpush1.bf16.msra.mxu0 %v329
  %464 = vmatprep.subr.bf16.mxu0 %v328
  %465 = vmatpush1.bf16.msra.mxu0 %v327
  %466 = vmatprep.subr.bf16.mxu0 %v326
  %467 = vmatpush1.bf16.msra.mxu0 %v325
  %468 = vmatprep.subr.bf16.mxu0 %v324
  %469 = vmatpush1.bf16.msra.mxu0 %v323
  %470 = vmatprep.subr.bf16.mxu0 %v322
  %471 = vmatpush1.bf16.msra.mxu0 %v321
  %472 = vmatprep.subr.bf16.mxu0 %v352
  %473 = vmatpush2.bf16.msra.mxu0 %v351
  %474 = vmatprep.subr.bf16.mxu0 %v350
  %475 = vmatpush2.bf16.msra.mxu0 %v349
  %476 = vmatprep.subr.bf16.mxu0 %v348
  %477 = vmatpush2.bf16.msra.mxu0 %v347
  %478 = vmatprep.subr.bf16.mxu0 %v346
  %479 = vmatpush2.bf16.msra.mxu0 %v345
  %480 = vmatprep.subr.bf16.mxu0 %v344
  %481 = vmatpush2.bf16.msra.mxu0 %v343
  %482 = vmatprep.subr.bf16.mxu0 %v342
  %483 = vmatpush2.bf16.msra.mxu0 %v341
  %484 = vmatprep.subr.bf16.mxu0 %v340
  %485 = vmatpush2.bf16.msra.mxu0 %v339
  %486 = vmatprep.subr.bf16.mxu0 %v338
  %487 = vmatpush2.bf16.msra.mxu0 %v337
  %488 = vmatprep.mubr.bf16.mxu0 %v60
  %489 = vmatmul.mubr.bf16.gmra.mxu0 %v56
  %v490 = vpop.f32.mrf.mxu0
  %v491 = vadd.f32 0.0, %v490
  %v492 = vpop.f32.mrf.mxu0
  %v493 = vadd.f32 0.0, %v492
  %v494 = vpop.f32.mrf.mxu0
  %v495 = vpop.f32.mrf.mxu0
  %496 = vdwg.mxu0
  %497 = vmatprep.subr.bf16.mxu0 %v368
  %498 = vmatpush1.bf16.msra.mxu0 %v367
  %499 = vmatprep.subr.bf16.mxu0 %v366
  %500 = vmatpush1.bf16.msra.mxu0 %v365
  %501 = vmatprep.subr.bf16.mxu0 %v364
  %502 = vmatpush1.bf16.msra.mxu0 %v363
  %503 = vmatprep.subr.bf16.mxu0 %v362
  %504 = vmatpush1.bf16.msra.mxu0 %v361
  %505 = vmatprep.subr.bf16.mxu0 %v360
  %506 = vmatpush1.bf16.msra.mxu0 %v359
  %507 = vmatprep.subr.bf16.mxu0 %v358
  %508 = vmatpush1.bf16.msra.mxu0 %v357
  %509 = vmatprep.subr.bf16.mxu0 %v356
  %510 = vmatpush1.bf16.msra.mxu0 %v355
  %511 = vmatprep.subr.bf16.mxu0 %v354
  %512 = vmatpush1.bf16.msra.mxu0 %v353
  %513 = vmatprep.subr.bf16.mxu0 %v454
  %514 = vmatpush2.bf16.msra.mxu0 %v451
  %515 = vmatprep.subr.bf16.mxu0 %v382
  %516 = vmatpush2.bf16.msra.mxu0 %v381
  %517 = vmatprep.subr.bf16.mxu0 %v380
  %518 = vmatpush2.bf16.msra.mxu0 %v379
  %519 = vmatprep.subr.bf16.mxu0 %v378
  %520 = vmatpush2.bf16.msra.mxu0 %v377
  %521 = vmatprep.subr.bf16.mxu0 %v376
  %522 = vmatpush2.bf16.msra.mxu0 %v375
  %523 = vmatprep.subr.bf16.mxu0 %v374
  %524 = vmatpush2.bf16.msra.mxu0 %v373
  %525 = vmatprep.subr.bf16.mxu0 %v372
  %526 = vmatpush2.bf16.msra.mxu0 %v371
  %527 = vmatprep.subr.bf16.mxu0 %v370
  %528 = vmatpush2.bf16.msra.mxu0 %v369
  %529 = vmatprep.mubr.bf16.mxu0 %v448
  %530 = vmatmul.mubr.bf16.gmra.mxu0 %v64
  %v531 = vpop.f32.mrf.mxu0
  %v532 = vadd.f32 %v491, %v531
  %v533 = vpop.f32.mrf.mxu0
  %v534 = vadd.f32 %v493, %v533
  %v535 = vpop.f32.mrf.mxu0
  %v536 = vpop.f32.mrf.mxu0
  %537 = vdwg.mxu0
  %v540 = vrot.slane %v532, 4
  %v541 = vrot.slane %v534, 4
  %v544 = vmax.f32 %v532, %v540
  %v545 = vmax.f32 %v534, %v541
  %v546 = vld [vmem:[%s2] sm:$0x3]
  %v548 = vlaneseq
  %v549 = vshrl.u32 %v548, 7
  %v550 = vsub.s32 0, %v549
  %v551 = vrot.slane %v546, %v550
  %v552 = vlaneseq
  %v553 = vshrl.u32 %v552, 7
  %v554 = vsub.s32 1, %v553
  %v555 = vrot.slane %v546, %v554
  %v558 = vadd.f32 %v544, %v551
  %v559 = vadd.f32 %v545, %v555
  %vm560 = vcmp.gt.f32.partialorder %v558, 0.0
  %vm561 = vcmp.gt.f32.partialorder %v559, 0.0
  %v562 = vmin.f32 %v558, 0.0
  %v563 = vmin.f32 %v559, 0.0
  %v564 = vmul.f32 %v562, 1.442695
  %v565 = vpow.pop %v564
  %v566 = vmul.f32 %v563, 1.442695
  %v567 = vpow.pop %v566
  %v568 = vsub.f32 %v565, 1.0
  %v569 = vsub.f32 %v567, 1.0
  %v570 = vsel %vm560, %v558, %v568
  %v571 = vsel %vm561, %v559, %v569
  %v572 = vpack.c.bf16 %v570, %v570
  %v573 = vpack.c.bf16 %v571, %v571
  %v576 = vcombine.low %v572, %v573
  %v578 = vunpack.c.l.s4 1983009808
  %v579 = vunpack.c.0.s8 %v578
  %v580 = vlaneseq
  %v581 = vshrl.u32 %v580, 7
  %v582 = vsub.s32 %v579, %v581
  %v583 = vrot.slane %v576, %v582
  %vm585 = vcmask 584706
  %vm586 = vmor %vm585, %vm53
  %587 = vst.msk [vmem:[%s3] sm:$0xf] %vm586, %v583
  // Predicated region
  $region14: #{deep_conv_net_forward.7} parent=0 // pred_check
    _
  $region15: #{deep_conv_net_forward.7} parent=0 // pred_check_branch
    %589 = sbr.rel (0) target = $region17
  $region16: #{deep_conv_net_forward.7} parent=0 // pred_region
    _
  $region17: #{deep_conv_net_forward.7} parent=0 // pred_fallthru
    _
  // Predicated region
  $region18: #{deep_conv_net_forward.7} parent=0 // pred_check
    _
  $region19: #{deep_conv_net_forward.7} parent=0 // pred_check_branch
    %591 = sbr.rel (0) target = $region21
  $region20: #{deep_conv_net_forward.7} parent=0 // pred_region
    _
  $region21: #{deep_conv_net_forward.7} parent=0 // pred_fallthru
    _

</llo_original>
